<compile_context>
chip_gen: v6e
topology: v6e:2x2x1
jax: 0.10.0
libtpu: 0.0.40
codegen_flags: <defaults>
</compile_context>

<pallas_src>
import jax
import jax.numpy as jnp
from jax.experimental import pallas as pl
from jax.experimental.pallas import tpu as pltpu

NEG_BIG = -1.0e6
IDX_W = 128  # lane-dense width for the sampled-idx output slab


def _dot_nt(a, b):
    """a @ b.T on the MXU (transposed-RHS contraction), f32 accumulate."""
    return jax.lax.dot_general(
        a, b, dimension_numbers=(((1,), (1,)), ((), ())),
        preferred_element_type=jnp.float32)


def _decoder_step_kernel(encf_ref, ids_ref, h0_ref,
                         whf_ref, bhf_ref,
                         emb_ref, wih_ref, bih_ref,
                         wh2_ref, bh2_ref,
                         exph_ref, sumh_ref,
                         logp_ref, idx_ref,
                         h_s, sel_s, prev_s):
    t = pl.program_id(1)                   # decode step (inner, "arbitrary")
    Bt, SH = encf_ref.shape
    H = h0_ref.shape[1]
    S = ids_ref.shape[1]
    V = emb_ref.shape[0]
    VSP = wh2_ref.shape[1] - H             # padded extended-vocab width (x128)

    # ---- (re)initialize the recurrent carries at the start of each batch tile ----
    @pl.when(t == 0)
    def _():
        h_s[...] = h0_ref[...]
        sel_s[...] = jnp.zeros_like(sel_s)
        prev_s[...] = jnp.ones_like(prev_s)          # initial sampled token id = 1

    encf = encf_ref[...]                   # (Bt, S*H) flattened encoder outputs
    ids = ids_ref[...]                     # (Bt, S) int32
    h = h_s[...]                           # (Bt, H)
    sel = sel_s[...]                       # (Bt, H)
    prev_idx = prev_s[...]                 # (Bt, 1) int32

    iota_vs = jax.lax.broadcasted_iota(jnp.int32, (Bt, VSP), 1)

    # ---- fused prev-hidden matmul: [attn_W(h)+attn_b | W_hh@h + b_hh] ----
    hh = jnp.dot(h, whf_ref[...], preferred_element_type=jnp.float32) + bhf_ref[...]
    th = hh[:, :H]                         # attn_W(prev_hidden)
    h_r = hh[:, H:2 * H]
    h_z = hh[:, 2 * H:3 * H]
    h_n = hh[:, 3 * H:]

    # ---- attention (MXU via exp_h / sum_h constants; reverse dir reuses them NT) ----
    th_e = jnp.dot(th, exph_ref[...], preferred_element_type=jnp.float32)        # (Bt, S*H)
    attn_scores = jnp.dot(encf * th_e, sumh_ref[...],
                          preferred_element_type=jnp.float32)                    # (Bt, S)
    attn_scores = attn_scores - jnp.max(attn_scores, axis=1, keepdims=True)
    ew = jnp.exp(attn_scores)
    attn_w = ew / jnp.sum(ew, axis=1, keepdims=True)
    aw_e = _dot_nt(attn_w, sumh_ref[...])                                        # (Bt, S*H)
    context = _dot_nt(aw_e * encf, exph_ref[...])                                # (Bt, H)

    # ---- embed previous token (raw (V, E) table, one-hot lookup) ----
    # TODO(synk): reference masks strictly `prev_idx > vocab_size` (id == V is an
    # OOB lookup error there); here any id >= V is mapped to UNK (id 3).
    idx_e = jnp.where(prev_idx >= V, 3, prev_idx)                                # (Bt, 1)
    iota_v = jax.lax.broadcasted_iota(jnp.int32, (Bt, V), 1)
    onehot = (iota_v == idx_e).astype(jnp.float32)                               # (Bt, V)
    emb_rows = jnp.dot(onehot, emb_ref[...], preferred_element_type=jnp.float32)  # (Bt, E)

    # ---- single fused GRU input projection over [context | sel | embedded] ----
    rnn_in = jnp.concatenate([context, sel, emb_rows], axis=1)                   # (Bt, 2H+E)
    gi = jnp.dot(rnn_in, wih_ref[...], preferred_element_type=jnp.float32) + bih_ref[...]
    r = jax.nn.sigmoid(gi[:, :H] + h_r)
    z = jax.nn.sigmoid(gi[:, H:2 * H] + h_z)
    n = jnp.tanh(gi[:, 2 * H:] + r * h_n)
    h_new = (1.0 - z) * n + z * h                                                # (Bt, H)

    # ---- fused new-hidden matmul: [generation head (lane-padded) | copy_W] ----
    h2 = jnp.dot(h_new, wh2_ref[...], preferred_element_type=jnp.float32) + bh2_ref[...]
    gen_scores = jnp.where(iota_vs == 0, NEG_BIG, h2[:, :VSP])                   # (Bt, VSP)
    th2 = h2[:, VSP:]                                                            # (Bt, H)

    th2_e = jnp.dot(th2, exph_ref[...], preferred_element_type=jnp.float32)
    css = jnp.dot(encf * th2_e, sumh_ref[...], preferred_element_type=jnp.float32)  # (Bt, S)

    # ---- copy scores: scatter-add css[b,s] into lane ids[b,s] ----
    copy_scores = jnp.zeros((Bt, VSP), jnp.float32)
    present = jnp.zeros((Bt, VSP), jnp.bool_)
    for s in range(S):  # S is small & static here; fori_loop(unroll=k) at large S
        hit = iota_vs == ids[:, s:s + 1]
        copy_scores = copy_scores + jnp.where(hit, css[:, s:s + 1], 0.0)
        present = jnp.logical_or(present, hit)
    copy_scores = jnp.where(
        jnp.logical_or(jnp.logical_not(present), iota_vs == 0), NEG_BIG, copy_scores)

    # ---- joint softmax numerator; greedy sample directly on eg + ec ----
    m = jnp.maximum(jnp.max(gen_scores, axis=1, keepdims=True),
                    jnp.max(copy_scores, axis=1, keepdims=True))
    eg = jnp.exp(gen_scores - m)
    ec = jnp.exp(copy_scores - m)
    probs_un = eg + ec                                                            # unnormalized
    pmax = jnp.max(probs_un, axis=1, keepdims=True)
    cand = jnp.where(probs_un == pmax, iota_vs, VSP)
    sampled = jnp.min(cand, axis=1, keepdims=True).astype(jnp.int32)              # (Bt, 1)

    # ---- selective read for the next step ----
    pos_in_input = (ids == sampled).astype(jnp.float32)                           # (Bt, S)
    selected = pos_in_input * css
    l1 = jnp.maximum(jnp.sum(jnp.abs(selected), axis=1, keepdims=True), 1e-12)
    sel_norm = selected / l1
    sn_e = _dot_nt(sel_norm, sumh_ref[...])                                       # (Bt, S*H)
    sel_new = _dot_nt(sn_e * encf, exph_ref[...])                                 # (Bt, H)

    # ---- recurrence-critical stores first ----
    h_s[...] = h_new
    sel_s[...] = sel_new
    prev_s[...] = sampled
    idx_ref[0] = jnp.broadcast_to(sampled, (Bt, idx_ref.shape[2]))

    # ---- wide log + per-step log_probs writeback last (off the critical path) ----
    denom = jnp.sum(eg, axis=1, keepdims=True) + jnp.sum(ec, axis=1, keepdims=True)
    log_probs = jnp.log(probs_un / denom + 1e-10)
    logp_ref[0] = log_probs


def init_params(key, output_dim, emb_dim, enc_hid_dim, dec_hid_dim):
    H = dec_hid_dim * 2
    I = enc_hid_dim * 2 + H + emb_dim
    ks = jax.random.split(key, 12)
    s = 0.1
    return dict(
        attn_w=s * jax.random.normal(ks[0], (H, H), jnp.float32),
        attn_b=s * jax.random.normal(ks[1], (H,), jnp.float32),
        copy_w=s * jax.random.normal(ks[2], (H, H), jnp.float32),
        copy_b=s * jax.random.normal(ks[3], (H,), jnp.float32),
        emb=s * jax.random.normal(ks[4], (output_dim, emb_dim), jnp.float32),
        w_ih=s * jax.random.normal(ks[5], (3 * H, I), jnp.float32),
        w_hh=s * jax.random.normal(ks[6], (3 * H, H), jnp.float32),
        b_ih=s * jax.random.normal(ks[7], (3 * H,), jnp.float32),
        b_hh=s * jax.random.normal(ks[8], (3 * H,), jnp.float32),
        out_w=s * jax.random.normal(ks[9], (output_dim, H), jnp.float32),
        out_b=s * jax.random.normal(ks[10], (output_dim,), jnp.float32),
        # Note: self.fc and self.dropout exist in __init__ but are unused in forward().
    )


def decoder_forward(params, input_ids, hidden0, encoder_outputs, max_length, *,
                    batch_tile=8):
    B, S, H = encoder_outputs.shape
    V, E = params['emb'].shape
    VS = V + S
    T = max_length - 1
    f32 = jnp.float32

    BT = max(8, batch_tile)                        # sublane granularity floor
    B_pad = -(-B // BT) * BT
    NBT = B_pad // BT
    VS_pad = max(128, -(-VS // 128) * 128)         # lane-dense extended vocab
    SH = S * H

    def pad_b(x):
        return jnp.pad(x, [(0, B_pad - x.shape[0])] + [(0, 0)] * (x.ndim - 1))

    encf = pad_b(encoder_outputs.astype(f32)).reshape(B_pad, SH)
    ids_p = pad_b(input_ids.astype(jnp.int32))
    h0_p = pad_b(hidden0.astype(f32))

    # ---- fused / pre-transposed weights ----
    w_hfused = jnp.concatenate([params['attn_w'].T, params['w_hh'].T], axis=1)   # (H, 4H)
    b_hfused = jnp.concatenate([params['attn_b'], params['b_hh']])[None, :]      # (1, 4H)

    out_wT_pad = jnp.zeros((H, VS_pad), f32).at[:, :V].set(params['out_w'].T)
    out_b_pad = jnp.full((VS_pad,), NEG_BIG, f32).at[:V].set(params['out_b'])
    w_h2fused = jnp.concatenate([out_wT_pad, params['copy_w'].T], axis=1)        # (H, VSP+H)
    b_h2fused = jnp.concatenate([out_b_pad, params['copy_b']])[None, :]          # (1, VSP+H)

    w_ihT = params['w_ih'].T                       # (2H+E, 3H), input order [ctx|sel|emb]
    b_ih = params['b_ih'][None, :]                 # (1, 3H)
    emb = params['emb'].astype(f32)                # (V, E)

    # ---- 0/1 expand / block-sum constants (single pair; reverse dir uses NT dots) ----
    col = jnp.arange(SH)
    exp_h = (col[None, :] % H == jnp.arange(H)[:, None]).astype(f32)   # (H, S*H)
    sum_h = (col[:, None] // H == jnp.arange(S)[None, :]).astype(f32)  # (S*H, S)

    # index maps: b = batch tile ("parallel"), t = decode step ("arbitrary").
    # Pallas does not re-copy blocks whose index is unchanged between consecutive
    # grid steps, so the weight/constant blocks below are fetched once.
    b_map = lambda b, t: (b, 0)
    w_map = lambda b, t: (0, 0)
    o_map = lambda b, t: (t, b, 0)

    grid_spec = pltpu.PrefetchScalarGridSpec(
        num_scalar_prefetch=0,
        grid=(NBT, T),
        in_specs=[
            pl.BlockSpec((BT, SH), b_map),            # flattened encoder outputs
            pl.BlockSpec((BT, S), b_map),             # input token ids (int32)
            pl.BlockSpec((BT, H), b_map),             # initial hidden
            pl.BlockSpec((H, 4 * H), w_map),          # [attn_W^T | W_hh^T]
            pl.BlockSpec((1, 4 * H), w_map),          # [attn_b | b_hh]
            pl.BlockSpec((V, E), w_map),              # raw embedding table
            pl.BlockSpec((2 * H + E, 3 * H), w_map),  # W_ih^T (ctx|sel|emb fused)
            pl.BlockSpec((1, 3 * H), w_map),          # b_ih
            pl.BlockSpec((H, VS_pad + H), w_map),     # [out_W^T padded | copy_W^T]
            pl.BlockSpec((1, VS_pad + H), w_map),     # [out_b padded | copy_b]
            pl.BlockSpec((H, SH), w_map),             # exp_h
            pl.BlockSpec((SH, S), w_map),             # sum_h
        ],
        out_specs=[
            pl.BlockSpec((1, BT, VS_pad), o_map),     # per-step log_probs slab
            pl.BlockSpec((1, BT, IDX_W), o_map),      # per-step sampled idx (lane-dense)
        ],
        scratch_shapes=[
            pltpu.VMEM((BT, H), jnp.float32),         # GRU hidden carry
            pltpu.VMEM((BT, H), jnp.float32),         # selective-read carry
            pltpu.VMEM((BT, 1), jnp.int32),           # previously sampled token carry
        ],
    )

    # explicit VMEM budget: double-buffered inputs/outputs + scratch + headroom
    def _nbytes(shape, itemsize=4):
        n = 1
        for d in shape:
            n *= d
        return n * itemsize

    resident = (_nbytes((BT, SH)) + _nbytes((BT, S)) + _nbytes((BT, H))
                + _nbytes((H, 4 * H)) + _nbytes((1, 4 * H)) + _nbytes((V, E))
                + _nbytes((2 * H + E, 3 * H)) + _nbytes((1, 3 * H))
                + _nbytes((H, VS_pad + H)) + _nbytes((1, VS_pad + H))
                + _nbytes((H, SH)) + _nbytes((SH, S)))
    out_slabs = _nbytes((1, BT, VS_pad)) + _nbytes((1, BT, IDX_W))
    scratch = 2 * _nbytes((BT, H)) + _nbytes((BT, 1))
    vmem_limit = int(min(max(2 * resident + 2 * out_slabs + scratch + (8 << 20),
                             16 << 20), 100 << 20))

    logp_seq, idx_seq = pl.pallas_call(
        _decoder_step_kernel,
        out_shape=(jax.ShapeDtypeStruct((T, B_pad, VS_pad), jnp.float32),
                   jax.ShapeDtypeStruct((T, B_pad, IDX_W), jnp.int32)),
        grid_spec=grid_spec,
        compiler_params=pltpu.CompilerParams(
            dimension_semantics=("parallel", "arbitrary"),
            vmem_limit_bytes=vmem_limit),
    )(encf, ids_p, h0_p,
      w_hfused, b_hfused,
      emb, w_ihT, b_ih,
      w_h2fused, b_h2fused,
      exp_h, sum_h)

    # strip batch / lane padding
    logp_seq = logp_seq[:, :B, :VS]                                      # (T, B, V+S)
    idx_seq = idx_seq[:, :B, :1]                                         # (T, B, 1)

    # forward() prepends sos_output (all 2.0) and the initial sampled_idx (all 1),
    # stacks along dim=1 and permutes decoder_outputs to (max_length, B, V+S).
    sos = jnp.full((1, B, VS), 2.0, jnp.float32)
    decoder_outputs = jnp.concatenate([sos, logp_seq], axis=0)           # (max_length, B, V+S)
    init_idx = jnp.ones((B, 1, 1), jnp.int32)
    sampled_idxs = jnp.concatenate(
        [init_idx, jnp.transpose(idx_seq, (1, 0, 2))], axis=1)           # (B, max_length, 1)
    return decoder_outputs, sampled_idxs


if __name__ == "__main__":
    B, S = 2, 8
    output_dim, emb_dim = 16, 8
    enc_hid_dim = dec_hid_dim = 8          # bmm in `step` requires enc_hid*2 == dec_hid*2
    H = dec_hid_dim * 2
    max_length = 6

    key = jax.random.PRNGKey(0)
    kp, k1, k2, k3 = jax.random.split(key, 4)
    params = init_params(kp, output_dim, emb_dim, enc_hid_dim, dec_hid_dim)
    encoder_outputs = jax.random.normal(k1, (B, S, enc_hid_dim * 2), jnp.float32)
    hidden0 = jax.random.normal(k2, (B, H), jnp.float32)
    input_ids = jax.random.randint(k3, (B, S), 0, output_dim)

    dec_outs, sampled = decoder_forward(params, input_ids, hidden0, encoder_outputs, max_length)
    jax.block_until_ready((dec_outs, sampled))
    assert dec_outs.shape == (max_length, B, output_dim + S)
    assert sampled.shape == (B, max_length, 1)
    assert bool(jnp.isfinite(dec_outs).all())
    assert bool((sampled >= 0).all()) and bool((sampled < output_dim + S).all())
    print("KERNEL_OK")
</pallas_src>

<mosaic_0001>
module attributes {stable_mosaic.version = 11 : i64} {
  func.func @_decoder_step_kernel(%arg0: i32, %arg1: i32, %arg2: memref<8x128xf32, #tpu.memory_space<vmem>>, %arg3: memref<8x8xi32, #tpu.memory_space<vmem>>, %arg4: memref<8x16xf32, #tpu.memory_space<vmem>>, %arg5: memref<16x64xf32, #tpu.memory_space<vmem>>, %arg6: memref<1x64xf32, #tpu.memory_space<vmem>>, %arg7: memref<16x8xf32, #tpu.memory_space<vmem>>, %arg8: memref<40x48xf32, #tpu.memory_space<vmem>>, %arg9: memref<1x48xf32, #tpu.memory_space<vmem>>, %arg10: memref<16x144xf32, #tpu.memory_space<vmem>>, %arg11: memref<1x144xf32, #tpu.memory_space<vmem>>, %arg12: memref<16x128xf32, #tpu.memory_space<vmem>>, %arg13: memref<128x8xf32, #tpu.memory_space<vmem>>, %arg14: memref<1x8x128xf32, #tpu.memory_space<vmem>>, %arg15: memref<1x8x128xi32, #tpu.memory_space<vmem>>, %arg16: memref<8x16xf32, #tpu.memory_space<vmem>>, %arg17: memref<8x16xf32, #tpu.memory_space<vmem>>, %arg18: memref<8x1xi32, #tpu.memory_space<vmem>>) attributes {dimension_semantics = [#tpu.dimension_semantics<parallel>, #tpu.dimension_semantics<arbitrary>], iteration_bounds = array<i64: 1, 5>, scalar_prefetch = 0 : i64, scratch_operands = 3 : i64, tpu.core_type = #tpu.core_type<tc>, window_params = [{transform_indices = @transform_0, window_bounds = array<i64: 8, 128>}, {transform_indices = @transform_1, window_bounds = array<i64: 8, 8>}, {transform_indices = @transform_2, window_bounds = array<i64: 8, 16>}, {pipeline_mode = #tpu.pipeline_mode<synchronous>, transform_indices = @transform_3, window_bounds = array<i64: 16, 64>}, {pipeline_mode = #tpu.pipeline_mode<synchronous>, transform_indices = @transform_4, window_bounds = array<i64: 1, 64>}, {pipeline_mode = #tpu.pipeline_mode<synchronous>, transform_indices = @transform_5, window_bounds = array<i64: 16, 8>}, {pipeline_mode = #tpu.pipeline_mode<synchronous>, transform_indices = @transform_6, window_bounds = array<i64: 40, 48>}, {pipeline_mode = #tpu.pipeline_mode<synchronous>, transform_indices = @transform_7, window_bounds = array<i64: 1, 48>}, {pipeline_mode = #tpu.pipeline_mode<synchronous>, transform_indices = @transform_8, window_bounds = array<i64: 16, 144>}, {pipeline_mode = #tpu.pipeline_mode<synchronous>, transform_indices = @transform_9, window_bounds = array<i64: 1, 144>}, {pipeline_mode = #tpu.pipeline_mode<synchronous>, transform_indices = @transform_10, window_bounds = array<i64: 16, 128>}, {pipeline_mode = #tpu.pipeline_mode<synchronous>, transform_indices = @transform_11, window_bounds = array<i64: 128, 8>}, {transform_indices = @transform_12, window_bounds = array<i64: 1, 8, 128>}, {transform_indices = @transform_13, window_bounds = array<i64: 1, 8, 128>}]} {
    %c0_i32 = arith.constant 0 : i32
    %0 = arith.cmpi eq, %arg1, %c0_i32 : i32
    %1 = arith.extui %0 : i1 to i32
    %c0_i32_0 = arith.constant 0 : i32
    %2 = arith.cmpi ne, %1, %c0_i32_0 : i32
    scf.if %2 {
      %c0_91 = arith.constant 0 : index
      %c0_92 = arith.constant 0 : index
      %239 = vector.load %arg4[%c0_91, %c0_92] : memref<8x16xf32, #tpu.memory_space<vmem>>, vector<8x16xf32>
      %c0_93 = arith.constant 0 : index
      %c0_94 = arith.constant 0 : index
      %240 = vector.load %arg16[%c0_93, %c0_94] : memref<8x16xf32, #tpu.memory_space<vmem>>, vector<8x16xf32>
      tpu.vector_store %arg16[%c0_93, %c0_94], %239 {strides = array<i32>} : memref<8x16xf32, #tpu.memory_space<vmem>>, vector<8x16xf32>,
      %cst_95 = arith.constant 0.000000e+00 : f32
      %241 = vector.broadcast %cst_95 : f32 to vector<8x16xf32>
      %c0_96 = arith.constant 0 : index
      %c0_97 = arith.constant 0 : index
      %242 = vector.load %arg17[%c0_96, %c0_97] : memref<8x16xf32, #tpu.memory_space<vmem>>, vector<8x16xf32>
      tpu.vector_store %arg17[%c0_96, %c0_97], %241 {strides = array<i32>} : memref<8x16xf32, #tpu.memory_space<vmem>>, vector<8x16xf32>,
      %c1_i32 = arith.constant 1 : i32
      %243 = vector.broadcast %c1_i32 : i32 to vector<8x1xi32>
      %c0_98 = arith.constant 0 : index
      %c0_99 = arith.constant 0 : index
      %244 = vector.load %arg18[%c0_98, %c0_99] : memref<8x1xi32, #tpu.memory_space<vmem>>, vector<8x1xi32>
      tpu.vector_store %arg18[%c0_98, %c0_99], %243 {strides = array<i32>} : memref<8x1xi32, #tpu.memory_space<vmem>>, vector<8x1xi32>,
    } else {
    }
    %c0 = arith.constant 0 : index
    %c0_1 = arith.constant 0 : index
    %3 = vector.load %arg2[%c0, %c0_1] : memref<8x128xf32, #tpu.memory_space<vmem>>, vector<8x128xf32>
    %c0_2 = arith.constant 0 : index
    %c0_3 = arith.constant 0 : index
    %4 = vector.load %arg3[%c0_2, %c0_3] : memref<8x8xi32, #tpu.memory_space<vmem>>, vector<8x8xi32>
    %c0_4 = arith.constant 0 : index
    %c0_5 = arith.constant 0 : index
    %5 = vector.load %arg16[%c0_4, %c0_5] : memref<8x16xf32, #tpu.memory_space<vmem>>, vector<8x16xf32>
    %c0_6 = arith.constant 0 : index
    %c0_7 = arith.constant 0 : index
    %6 = vector.load %arg17[%c0_6, %c0_7] : memref<8x16xf32, #tpu.memory_space<vmem>>, vector<8x16xf32>
    %c0_8 = arith.constant 0 : index
    %c0_9 = arith.constant 0 : index
    %7 = vector.load %arg18[%c0_8, %c0_9] : memref<8x1xi32, #tpu.memory_space<vmem>>, vector<8x1xi32>
    %8 = tpu.iota {dimensions = array<i32: 1>} : vector<8x128xi32>
    %c0_10 = arith.constant 0 : index
    %c0_11 = arith.constant 0 : index
    %9 = vector.load %arg5[%c0_10, %c0_11] : memref<16x64xf32, #tpu.memory_space<vmem>>, vector<16x64xf32>
    %cst = arith.constant dense<0.000000e+00> : vector<8x64xf32>
    %10 = tpu.matmul %5, %9, %cst {dimension_numbers = #tpu.dot_dimension_numbers<[1], [0], [0], [1], [0, 0, 1, 1], [], []>} : vector<8x16xf32>, vector<16x64xf32>, vector<8x64xf32> -> vector<8x64xf32>
    %c0_12 = arith.constant 0 : index
    %c0_13 = arith.constant 0 : index
    %11 = vector.load %arg6[%c0_12, %c0_13] : memref<1x64xf32, #tpu.memory_space<vmem>>, vector<1x64xf32>
    %12 = vector.broadcast %11 : vector<1x64xf32> to vector<8x64xf32>
    %13 = arith.addf %10, %12 : vector<8x64xf32>
    %14 = vector.extract_strided_slice %13 {offsets = [0, 0], sizes = [8, 16], strides = [1, 1]} : vector<8x64xf32> to vector<8x16xf32>
    %15 = vector.extract_strided_slice %13 {offsets = [0, 16], sizes = [8, 16], strides = [1, 1]} : vector<8x64xf32> to vector<8x16xf32>
    %16 = vector.extract_strided_slice %13 {offsets = [0, 32], sizes = [8, 16], strides = [1, 1]} : vector<8x64xf32> to vector<8x16xf32>
    %17 = vector.extract_strided_slice %13 {offsets = [0, 48], sizes = [8, 16], strides = [1, 1]} : vector<8x64xf32> to vector<8x16xf32>
    %c0_14 = arith.constant 0 : index
    %c0_15 = arith.constant 0 : index
    %18 = vector.load %arg12[%c0_14, %c0_15] : memref<16x128xf32, #tpu.memory_space<vmem>>, vector<16x128xf32>
    %cst_16 = arith.constant dense<0.000000e+00> : vector<8x128xf32>
    %19 = tpu.matmul %14, %18, %cst_16 {dimension_numbers = #tpu.dot_dimension_numbers<[1], [0], [0], [1], [0, 0, 1, 1], [], []>} : vector<8x16xf32>, vector<16x128xf32>, vector<8x128xf32> -> vector<8x128xf32>
    %20 = arith.mulf %3, %19 : vector<8x128xf32>
    %c0_17 = arith.constant 0 : index
    %c0_18 = arith.constant 0 : index
    %21 = vector.load %arg13[%c0_17, %c0_18] : memref<128x8xf32, #tpu.memory_space<vmem>>, vector<128x8xf32>
    %cst_19 = arith.constant dense<0.000000e+00> : vector<8x8xf32>
    %22 = tpu.matmul %20, %21, %cst_19 {dimension_numbers = #tpu.dot_dimension_numbers<[1], [0], [0], [1], [0, 0, 1, 1], [], []>} : vector<8x128xf32>, vector<128x8xf32>, vector<8x8xf32> -> vector<8x8xf32>
    %cst_20 = arith.constant dense<0xFF800000> : vector<8xf32>
    %23 = vector.multi_reduction <maximumf>, %22, %cst_20 [1] : vector<8x8xf32> to vector<8xf32>
    %24 = vector.shape_cast %23 : vector<8xf32> to vector<8x1xf32>
    %25 = vector.broadcast %24 : vector<8x1xf32> to vector<8x8xf32>
    %26 = arith.subf %22, %25 : vector<8x8xf32>
    %27 = math.exp %26 : vector<8x8xf32>
    %cst_21 = arith.constant dense<0.000000e+00> : vector<8xf32>
    %28 = vector.multi_reduction <add>, %27, %cst_21 [1] : vector<8x8xf32> to vector<8xf32>
    %29 = vector.shape_cast %28 : vector<8xf32> to vector<8x1xf32>
    %30 = vector.broadcast %29 : vector<8x1xf32> to vector<8x8xf32>
    %31 = arith.divf %27, %30 : vector<8x8xf32>
    %c0_22 = arith.constant 0 : index
    %c0_23 = arith.constant 0 : index
    %32 = vector.load %arg13[%c0_22, %c0_23] : memref<128x8xf32, #tpu.memory_space<vmem>>, vector<128x8xf32>
    %cst_24 = arith.constant dense<0.000000e+00> : vector<8x128xf32>
    %33 = tpu.matmul %31, %32, %cst_24 {dimension_numbers = #tpu.dot_dimension_numbers<[1], [1], [0], [0], [0, 0, 1, 0], [], []>} : vector<8x8xf32>, vector<128x8xf32>, vector<8x128xf32> -> vector<8x128xf32>
    %34 = arith.mulf %33, %3 : vector<8x128xf32>
    %c0_25 = arith.constant 0 : index
    %c0_26 = arith.constant 0 : index
    %35 = vector.load %arg12[%c0_25, %c0_26] : memref<16x128xf32, #tpu.memory_space<vmem>>, vector<16x128xf32>
    %cst_27 = arith.constant dense<0.000000e+00> : vector<8x16xf32>
    %36 = tpu.matmul %34, %35, %cst_27 {dimension_numbers = #tpu.dot_dimension_numbers<[1], [1], [0], [0], [0, 0, 1, 0], [], []>} : vector<8x128xf32>, vector<16x128xf32>, vector<8x16xf32> -> vector<8x16xf32>
    %c16_i32 = arith.constant 16 : i32
    %37 = vector.broadcast %c16_i32 : i32 to vector<8x1xi32>
    %38 = arith.cmpi sge, %7, %37 : vector<8x1xi32>
    %c3_i32 = arith.constant 3 : i32
    %39 = vector.broadcast %c3_i32 : i32 to vector<8x1xi32>
    %40 = arith.select %38, %39, %7 : vector<8x1xi1>, vector<8x1xi32>
    %41 = tpu.iota {dimensions = array<i32: 1>} : vector<8x16xi32>
    %42 = vector.broadcast %40 : vector<8x1xi32> to vector<8x16xi32>
    %43 = arith.cmpi eq, %41, %42 : vector<8x16xi32>
    %44 = arith.extui %43 : vector<8x16xi1> to vector<8x16xi32>
    %45 = arith.sitofp %44 : vector<8x16xi32> to vector<8x16xf32>
    %c0_28 = arith.constant 0 : index
    %c0_29 = arith.constant 0 : index
    %46 = vector.load %arg7[%c0_28, %c0_29] : memref<16x8xf32, #tpu.memory_space<vmem>>, vector<16x8xf32>
    %cst_30 = arith.constant dense<0.000000e+00> : vector<8x8xf32>
    %47 = tpu.matmul %45, %46, %cst_30 {dimension_numbers = #tpu.dot_dimension_numbers<[1], [0], [0], [1], [0, 0, 1, 1], [], []>} : vector<8x16xf32>, vector<16x8xf32>, vector<8x8xf32> -> vector<8x8xf32>
    %48 = tpu.concatenate %36, %6, %47 in 1 : vector<8x16xf32>, vector<8x16xf32>, vector<8x8xf32> -> vector<8x40xf32>
    %c0_31 = arith.constant 0 : index
    %c0_32 = arith.constant 0 : index
    %49 = vector.load %arg8[%c0_31, %c0_32] : memref<40x48xf32, #tpu.memory_space<vmem>>, vector<40x48xf32>
    %cst_33 = arith.constant dense<0.000000e+00> : vector<8x48xf32>
    %50 = tpu.matmul %48, %49, %cst_33 {dimension_numbers = #tpu.dot_dimension_numbers<[1], [0], [0], [1], [0, 0, 1, 1], [], []>} : vector<8x40xf32>, vector<40x48xf32>, vector<8x48xf32> -> vector<8x48xf32>
    %c0_34 = arith.constant 0 : index
    %c0_35 = arith.constant 0 : index
    %51 = vector.load %arg9[%c0_34, %c0_35] : memref<1x48xf32, #tpu.memory_space<vmem>>, vector<1x48xf32>
    %52 = vector.broadcast %51 : vector<1x48xf32> to vector<8x48xf32>
    %53 = arith.addf %50, %52 : vector<8x48xf32>
    %54 = vector.extract_strided_slice %53 {offsets = [0, 0], sizes = [8, 16], strides = [1, 1]} : vector<8x48xf32> to vector<8x16xf32>
    %55 = arith.addf %54, %15 : vector<8x16xf32>
    %56 = arith.negf %55 : vector<8x16xf32>
    %57 = math.exp %56 : vector<8x16xf32>
    %cst_36 = arith.constant 1.000000e+00 : f32
    %58 = vector.broadcast %cst_36 : f32 to vector<8x16xf32>
    %59 = arith.addf %58, %57 : vector<8x16xf32>
    %60 = arith.divf %58, %59 : vector<8x16xf32>
    %61 = vector.extract_strided_slice %53 {offsets = [0, 16], sizes = [8, 16], strides = [1, 1]} : vector<8x48xf32> to vector<8x16xf32>
    %62 = arith.addf %61, %16 : vector<8x16xf32>
    %63 = arith.negf %62 : vector<8x16xf32>
    %64 = math.exp %63 : vector<8x16xf32>
    %cst_37 = arith.constant 1.000000e+00 : f32
    %65 = vector.broadcast %cst_37 : f32 to vector<8x16xf32>
    %66 = arith.addf %65, %64 : vector<8x16xf32>
    %67 = arith.divf %65, %66 : vector<8x16xf32>
    %68 = vector.extract_strided_slice %53 {offsets = [0, 32], sizes = [8, 16], strides = [1, 1]} : vector<8x48xf32> to vector<8x16xf32>
    %69 = arith.mulf %60, %17 : vector<8x16xf32>
    %70 = arith.addf %68, %69 : vector<8x16xf32>
    %71 = math.tanh %70 : vector<8x16xf32>
    %cst_38 = arith.constant 1.000000e+00 : f32
    %72 = vector.broadcast %cst_38 : f32 to vector<8x16xf32>
    %73 = arith.subf %72, %67 : vector<8x16xf32>
    %74 = arith.mulf %73, %71 : vector<8x16xf32>
    %75 = arith.mulf %67, %5 : vector<8x16xf32>
    %76 = arith.addf %74, %75 : vector<8x16xf32>
    %c0_39 = arith.constant 0 : index
    %c0_40 = arith.constant 0 : index
    %77 = vector.load %arg10[%c0_39, %c0_40] : memref<16x144xf32, #tpu.memory_space<vmem>>, vector<16x144xf32>
    %cst_41 = arith.constant dense<0.000000e+00> : vector<8x144xf32>
    %78 = tpu.matmul %76, %77, %cst_41 {dimension_numbers = #tpu.dot_dimension_numbers<[1], [0], [0], [1], [0, 0, 1, 1], [], []>} : vector<8x16xf32>, vector<16x144xf32>, vector<8x144xf32> -> vector<8x144xf32>
    %c0_42 = arith.constant 0 : index
    %c0_43 = arith.constant 0 : index
    %79 = vector.load %arg11[%c0_42, %c0_43] : memref<1x144xf32, #tpu.memory_space<vmem>>, vector<1x144xf32>
    %80 = vector.broadcast %79 : vector<1x144xf32> to vector<8x144xf32>
    %81 = arith.addf %78, %80 : vector<8x144xf32>
    %c0_i32_44 = arith.constant 0 : i32
    %82 = vector.broadcast %c0_i32_44 : i32 to vector<8x128xi32>
    %83 = arith.cmpi eq, %8, %82 : vector<8x128xi32>
    %84 = vector.extract_strided_slice %81 {offsets = [0, 0], sizes = [8, 128], strides = [1, 1]} : vector<8x144xf32> to vector<8x128xf32>
    %cst_45 = arith.constant -1.000000e+06 : f32
    %85 = vector.broadcast %cst_45 : f32 to vector<8x128xf32>
    %86 = arith.select %83, %85, %84 : vector<8x128xi1>, vector<8x128xf32>
    %87 = vector.extract_strided_slice %81 {offsets = [0, 128], sizes = [8, 16], strides = [1, 1]} : vector<8x144xf32> to vector<8x16xf32>
    %c0_46 = arith.constant 0 : index
    %c0_47 = arith.constant 0 : index
    %88 = vector.load %arg12[%c0_46, %c0_47] : memref<16x128xf32, #tpu.memory_space<vmem>>, vector<16x128xf32>
    %cst_48 = arith.constant dense<0.000000e+00> : vector<8x128xf32>
    %89 = tpu.matmul %87, %88, %cst_48 {dimension_numbers = #tpu.dot_dimension_numbers<[1], [0], [0], [1], [0, 0, 1, 1], [], []>} : vector<8x16xf32>, vector<16x128xf32>, vector<8x128xf32> -> vector<8x128xf32>
    %90 = arith.mulf %3, %89 : vector<8x128xf32>
    %c0_49 = arith.constant 0 : index
    %c0_50 = arith.constant 0 : index
    %91 = vector.load %arg13[%c0_49, %c0_50] : memref<128x8xf32, #tpu.memory_space<vmem>>, vector<128x8xf32>
    %cst_51 = arith.constant dense<0.000000e+00> : vector<8x8xf32>
    %92 = tpu.matmul %90, %91, %cst_51 {dimension_numbers = #tpu.dot_dimension_numbers<[1], [0], [0], [1], [0, 0, 1, 1], [], []>} : vector<8x128xf32>, vector<128x8xf32>, vector<8x8xf32> -> vector<8x8xf32>
    %cst_52 = arith.constant 0.000000e+00 : f32
    %93 = vector.broadcast %cst_52 : f32 to vector<8x128xf32>
    %false = arith.constant false
    %94 = vector.broadcast %false : i1 to vector<8x128xi1>
    %95 = vector.extract_strided_slice %4 {offsets = [0, 0], sizes = [8, 1], strides = [1, 1]} : vector<8x8xi32> to vector<8x1xi32>
    %96 = vector.broadcast %95 : vector<8x1xi32> to vector<8x128xi32>
    %97 = arith.cmpi eq, %8, %96 : vector<8x128xi32>
    %98 = vector.extract_strided_slice %92 {offsets = [0, 0], sizes = [8, 1], strides = [1, 1]} : vector<8x8xf32> to vector<8x1xf32>
    %cst_53 = arith.constant 0.000000e+00 : f32
    %99 = vector.shape_cast %98 : vector<8x1xf32> to vector<8x1xf32>
    %100 = vector.broadcast %99 : vector<8x1xf32> to vector<8x128xf32>
    %101 = vector.broadcast %cst_53 : f32 to vector<8x128xf32>
    %102 = arith.select %97, %100, %101 : vector<8x128xi1>, vector<8x128xf32>
    %103 = arith.addf %93, %102 : vector<8x128xf32>
    %104 = arith.ori %94, %97 : vector<8x128xi1>
    %105 = vector.extract_strided_slice %4 {offsets = [0, 1], sizes = [8, 1], strides = [1, 1]} : vector<8x8xi32> to vector<8x1xi32>
    %106 = vector.broadcast %105 : vector<8x1xi32> to vector<8x128xi32>
    %107 = arith.cmpi eq, %8, %106 : vector<8x128xi32>
    %108 = vector.extract_strided_slice %92 {offsets = [0, 1], sizes = [8, 1], strides = [1, 1]} : vector<8x8xf32> to vector<8x1xf32>
    %cst_54 = arith.constant 0.000000e+00 : f32
    %109 = vector.shape_cast %108 : vector<8x1xf32> to vector<8x1xf32>
    %110 = vector.broadcast %109 : vector<8x1xf32> to vector<8x128xf32>
    %111 = vector.broadcast %cst_54 : f32 to vector<8x128xf32>
    %112 = arith.select %107, %110, %111 : vector<8x128xi1>, vector<8x128xf32>
    %113 = arith.addf %103, %112 : vector<8x128xf32>
    %114 = arith.ori %104, %107 : vector<8x128xi1>
    %115 = vector.extract_strided_slice %4 {offsets = [0, 2], sizes = [8, 1], strides = [1, 1]} : vector<8x8xi32> to vector<8x1xi32>
    %116 = vector.broadcast %115 : vector<8x1xi32> to vector<8x128xi32>
    %117 = arith.cmpi eq, %8, %116 : vector<8x128xi32>
    %118 = vector.extract_strided_slice %92 {offsets = [0, 2], sizes = [8, 1], strides = [1, 1]} : vector<8x8xf32> to vector<8x1xf32>
    %cst_55 = arith.constant 0.000000e+00 : f32
    %119 = vector.shape_cast %118 : vector<8x1xf32> to vector<8x1xf32>
    %120 = vector.broadcast %119 : vector<8x1xf32> to vector<8x128xf32>
    %121 = vector.broadcast %cst_55 : f32 to vector<8x128xf32>
    %122 = arith.select %117, %120, %121 : vector<8x128xi1>, vector<8x128xf32>
    %123 = arith.addf %113, %122 : vector<8x128xf32>
    %124 = arith.ori %114, %117 : vector<8x128xi1>
    %125 = vector.extract_strided_slice %4 {offsets = [0, 3], sizes = [8, 1], strides = [1, 1]} : vector<8x8xi32> to vector<8x1xi32>
    %126 = vector.broadcast %125 : vector<8x1xi32> to vector<8x128xi32>
    %127 = arith.cmpi eq, %8, %126 : vector<8x128xi32>
    %128 = vector.extract_strided_slice %92 {offsets = [0, 3], sizes = [8, 1], strides = [1, 1]} : vector<8x8xf32> to vector<8x1xf32>
    %cst_56 = arith.constant 0.000000e+00 : f32
    %129 = vector.shape_cast %128 : vector<8x1xf32> to vector<8x1xf32>
    %130 = vector.broadcast %129 : vector<8x1xf32> to vector<8x128xf32>
    %131 = vector.broadcast %cst_56 : f32 to vector<8x128xf32>
    %132 = arith.select %127, %130, %131 : vector<8x128xi1>, vector<8x128xf32>
    %133 = arith.addf %123, %132 : vector<8x128xf32>
    %134 = arith.ori %124, %127 : vector<8x128xi1>
    %135 = vector.extract_strided_slice %4 {offsets = [0, 4], sizes = [8, 1], strides = [1, 1]} : vector<8x8xi32> to vector<8x1xi32>
    %136 = vector.broadcast %135 : vector<8x1xi32> to vector<8x128xi32>
    %137 = arith.cmpi eq, %8, %136 : vector<8x128xi32>
    %138 = vector.extract_strided_slice %92 {offsets = [0, 4], sizes = [8, 1], strides = [1, 1]} : vector<8x8xf32> to vector<8x1xf32>
    %cst_57 = arith.constant 0.000000e+00 : f32
    %139 = vector.shape_cast %138 : vector<8x1xf32> to vector<8x1xf32>
    %140 = vector.broadcast %139 : vector<8x1xf32> to vector<8x128xf32>
    %141 = vector.broadcast %cst_57 : f32 to vector<8x128xf32>
    %142 = arith.select %137, %140, %141 : vector<8x128xi1>, vector<8x128xf32>
    %143 = arith.addf %133, %142 : vector<8x128xf32>
    %144 = arith.ori %134, %137 : vector<8x128xi1>
    %145 = vector.extract_strided_slice %4 {offsets = [0, 5], sizes = [8, 1], strides = [1, 1]} : vector<8x8xi32> to vector<8x1xi32>
    %146 = vector.broadcast %145 : vector<8x1xi32> to vector<8x128xi32>
    %147 = arith.cmpi eq, %8, %146 : vector<8x128xi32>
    %148 = vector.extract_strided_slice %92 {offsets = [0, 5], sizes = [8, 1], strides = [1, 1]} : vector<8x8xf32> to vector<8x1xf32>
    %cst_58 = arith.constant 0.000000e+00 : f32
    %149 = vector.shape_cast %148 : vector<8x1xf32> to vector<8x1xf32>
    %150 = vector.broadcast %149 : vector<8x1xf32> to vector<8x128xf32>
    %151 = vector.broadcast %cst_58 : f32 to vector<8x128xf32>
    %152 = arith.select %147, %150, %151 : vector<8x128xi1>, vector<8x128xf32>
    %153 = arith.addf %143, %152 : vector<8x128xf32>
    %154 = arith.ori %144, %147 : vector<8x128xi1>
    %155 = vector.extract_strided_slice %4 {offsets = [0, 6], sizes = [8, 1], strides = [1, 1]} : vector<8x8xi32> to vector<8x1xi32>
    %156 = vector.broadcast %155 : vector<8x1xi32> to vector<8x128xi32>
    %157 = arith.cmpi eq, %8, %156 : vector<8x128xi32>
    %158 = vector.extract_strided_slice %92 {offsets = [0, 6], sizes = [8, 1], strides = [1, 1]} : vector<8x8xf32> to vector<8x1xf32>
    %cst_59 = arith.constant 0.000000e+00 : f32
    %159 = vector.shape_cast %158 : vector<8x1xf32> to vector<8x1xf32>
    %160 = vector.broadcast %159 : vector<8x1xf32> to vector<8x128xf32>
    %161 = vector.broadcast %cst_59 : f32 to vector<8x128xf32>
    %162 = arith.select %157, %160, %161 : vector<8x128xi1>, vector<8x128xf32>
    %163 = arith.addf %153, %162 : vector<8x128xf32>
    %164 = arith.ori %154, %157 : vector<8x128xi1>
    %165 = vector.extract_strided_slice %4 {offsets = [0, 7], sizes = [8, 1], strides = [1, 1]} : vector<8x8xi32> to vector<8x1xi32>
    %166 = vector.broadcast %165 : vector<8x1xi32> to vector<8x128xi32>
    %167 = arith.cmpi eq, %8, %166 : vector<8x128xi32>
    %168 = vector.extract_strided_slice %92 {offsets = [0, 7], sizes = [8, 1], strides = [1, 1]} : vector<8x8xf32> to vector<8x1xf32>
    %cst_60 = arith.constant 0.000000e+00 : f32
    %169 = vector.shape_cast %168 : vector<8x1xf32> to vector<8x1xf32>
    %170 = vector.broadcast %169 : vector<8x1xf32> to vector<8x128xf32>
    %171 = vector.broadcast %cst_60 : f32 to vector<8x128xf32>
    %172 = arith.select %167, %170, %171 : vector<8x128xi1>, vector<8x128xf32>
    %173 = arith.addf %163, %172 : vector<8x128xf32>
    %174 = arith.ori %164, %167 : vector<8x128xi1>
    %cst_61 = arith.constant dense<true> : vector<8x128xi1>
    %175 = arith.xori %174, %cst_61 : vector<8x128xi1>
    %c0_i32_62 = arith.constant 0 : i32
    %176 = vector.broadcast %c0_i32_62 : i32 to vector<8x128xi32>
    %177 = arith.cmpi eq, %8, %176 : vector<8x128xi32>
    %178 = arith.ori %175, %177 : vector<8x128xi1>
    %cst_63 = arith.constant -1.000000e+06 : f32
    %179 = vector.broadcast %cst_63 : f32 to vector<8x128xf32>
    %180 = arith.select %178, %179, %173 : vector<8x128xi1>, vector<8x128xf32>
    %cst_64 = arith.constant dense<0xFF800000> : vector<8xf32>
    %181 = vector.multi_reduction <maximumf>, %86, %cst_64 [1] : vector<8x128xf32> to vector<8xf32>
    %182 = vector.shape_cast %181 : vector<8xf32> to vector<8x1xf32>
    %cst_65 = arith.constant dense<0xFF800000> : vector<8xf32>
    %183 = vector.multi_reduction <maximumf>, %180, %cst_65 [1] : vector<8x128xf32> to vector<8xf32>
    %184 = vector.shape_cast %183 : vector<8xf32> to vector<8x1xf32>
    %185 = arith.maximumf %182, %184 : vector<8x1xf32>
    %186 = vector.broadcast %185 : vector<8x1xf32> to vector<8x128xf32>
    %187 = arith.subf %86, %186 : vector<8x128xf32>
    %188 = math.exp %187 : vector<8x128xf32>
    %189 = vector.broadcast %185 : vector<8x1xf32> to vector<8x128xf32>
    %190 = arith.subf %180, %189 : vector<8x128xf32>
    %191 = math.exp %190 : vector<8x128xf32>
    %192 = arith.addf %188, %191 : vector<8x128xf32>
    %cst_66 = arith.constant dense<0xFF800000> : vector<8xf32>
    %193 = vector.multi_reduction <maximumf>, %192, %cst_66 [1] : vector<8x128xf32> to vector<8xf32>
    %194 = vector.shape_cast %193 : vector<8xf32> to vector<8x1xf32>
    %195 = vector.broadcast %194 : vector<8x1xf32> to vector<8x128xf32>
    %196 = arith.cmpf oeq, %192, %195 : vector<8x128xf32>
    %c128_i32 = arith.constant 128 : i32
    %197 = vector.broadcast %c128_i32 : i32 to vector<8x128xi32>
    %198 = arith.select %196, %8, %197 : vector<8x128xi1>, vector<8x128xi32>
    %cst_67 = arith.constant dense<2147483647> : vector<8xi32>
    %199 = vector.multi_reduction <minsi>, %198, %cst_67 [1] : vector<8x128xi32> to vector<8xi32>
    %200 = vector.shape_cast %199 : vector<8xi32> to vector<8x1xi32>
    %201 = vector.broadcast %200 : vector<8x1xi32> to vector<8x8xi32>
    %202 = arith.cmpi eq, %4, %201 : vector<8x8xi32>
    %203 = arith.extui %202 : vector<8x8xi1> to vector<8x8xi32>
    %204 = arith.sitofp %203 : vector<8x8xi32> to vector<8x8xf32>
    %205 = arith.mulf %204, %92 : vector<8x8xf32>
    %206 = math.absf %205 : vector<8x8xf32>
    %cst_68 = arith.constant dense<0.000000e+00> : vector<8xf32>
    %207 = vector.multi_reduction <add>, %206, %cst_68 [1] : vector<8x8xf32> to vector<8xf32>
    %208 = vector.shape_cast %207 : vector<8xf32> to vector<8x1xf32>
    %cst_69 = arith.constant 9.99999996E-13 : f32
    %209 = vector.broadcast %cst_69 : f32 to vector<8x1xf32>
    %210 = arith.maximumf %208, %209 : vector<8x1xf32>
    %211 = vector.broadcast %210 : vector<8x1xf32> to vector<8x8xf32>
    %212 = arith.divf %205, %211 : vector<8x8xf32>
    %c0_70 = arith.constant 0 : index
    %c0_71 = arith.constant 0 : index
    %213 = vector.load %arg13[%c0_70, %c0_71] : memref<128x8xf32, #tpu.memory_space<vmem>>, vector<128x8xf32>
    %cst_72 = arith.constant dense<0.000000e+00> : vector<8x128xf32>
    %214 = tpu.matmul %212, %213, %cst_72 {dimension_numbers = #tpu.dot_dimension_numbers<[1], [1], [0], [0], [0, 0, 1, 0], [], []>} : vector<8x8xf32>, vector<128x8xf32>, vector<8x128xf32> -> vector<8x128xf32>
    %215 = arith.mulf %214, %3 : vector<8x128xf32>
    %c0_73 = arith.constant 0 : index
    %c0_74 = arith.constant 0 : index
    %216 = vector.load %arg12[%c0_73, %c0_74] : memref<16x128xf32, #tpu.memory_space<vmem>>, vector<16x128xf32>
    %cst_75 = arith.constant dense<0.000000e+00> : vector<8x16xf32>
    %217 = tpu.matmul %215, %216, %cst_75 {dimension_numbers = #tpu.dot_dimension_numbers<[1], [1], [0], [0], [0, 0, 1, 0], [], []>} : vector<8x128xf32>, vector<16x128xf32>, vector<8x16xf32> -> vector<8x16xf32>
    %c0_76 = arith.constant 0 : index
    %c0_77 = arith.constant 0 : index
    %218 = vector.load %arg16[%c0_76, %c0_77] : memref<8x16xf32, #tpu.memory_space<vmem>>, vector<8x16xf32>
    tpu.vector_store %arg16[%c0_76, %c0_77], %76 {strides = array<i32>} : memref<8x16xf32, #tpu.memory_space<vmem>>, vector<8x16xf32>,
    %c0_78 = arith.constant 0 : index
    %c0_79 = arith.constant 0 : index
    %219 = vector.load %arg17[%c0_78, %c0_79] : memref<8x16xf32, #tpu.memory_space<vmem>>, vector<8x16xf32>
    tpu.vector_store %arg17[%c0_78, %c0_79], %217 {strides = array<i32>} : memref<8x16xf32, #tpu.memory_space<vmem>>, vector<8x16xf32>,
    %c0_80 = arith.constant 0 : index
    %c0_81 = arith.constant 0 : index
    %220 = vector.load %arg18[%c0_80, %c0_81] : memref<8x1xi32, #tpu.memory_space<vmem>>, vector<8x1xi32>
    tpu.vector_store %arg18[%c0_80, %c0_81], %200 {strides = array<i32>} : memref<8x1xi32, #tpu.memory_space<vmem>>, vector<8x1xi32>,
    %221 = vector.shape_cast %200 : vector<8x1xi32> to vector<8x1xi32>
    %222 = vector.broadcast %221 : vector<8x1xi32> to vector<8x128xi32>
    %c0_82 = arith.constant 0 : index
    %c0_83 = arith.constant 0 : index
    %c0_84 = arith.constant 0 : index
    %223 = vector.load %arg15[%c0_82, %c0_83, %c0_84] : memref<1x8x128xi32, #tpu.memory_space<vmem>>, vector<1x8x128xi32>
    %224 = vector.shape_cast %223 : vector<1x8x128xi32> to vector<8x128xi32>
    %225 = vector.shape_cast %222 : vector<8x128xi32> to vector<1x8x128xi32>
    tpu.vector_store %arg15[%c0_82, %c0_83, %c0_84], %225 {strides = array<i32>} : memref<1x8x128xi32, #tpu.memory_space<vmem>>, vector<1x8x128xi32>,
    %cst_85 = arith.constant dense<0.000000e+00> : vector<8xf32>
    %226 = vector.multi_reduction <add>, %188, %cst_85 [1] : vector<8x128xf32> to vector<8xf32>
    %227 = vector.shape_cast %226 : vector<8xf32> to vector<8x1xf32>
    %cst_86 = arith.constant dense<0.000000e+00> : vector<8xf32>
    %228 = vector.multi_reduction <add>, %191, %cst_86 [1] : vector<8x128xf32> to vector<8xf32>
    %229 = vector.shape_cast %228 : vector<8xf32> to vector<8x1xf32>
    %230 = arith.addf %227, %229 : vector<8x1xf32>
    %231 = vector.broadcast %230 : vector<8x1xf32> to vector<8x128xf32>
    %232 = arith.divf %192, %231 : vector<8x128xf32>
    %cst_87 = arith.constant 1.000000e-10 : f32
    %233 = vector.broadcast %cst_87 : f32 to vector<8x128xf32>
    %234 = arith.addf %232, %233 : vector<8x128xf32>
    %235 = math.log %234 : vector<8x128xf32>
    %c0_88 = arith.constant 0 : index
    %c0_89 = arith.constant 0 : index
    %c0_90 = arith.constant 0 : index
    %236 = vector.load %arg14[%c0_88, %c0_89, %c0_90] : memref<1x8x128xf32, #tpu.memory_space<vmem>>, vector<1x8x128xf32>
    %237 = vector.shape_cast %236 : vector<1x8x128xf32> to vector<8x128xf32>
    %238 = vector.shape_cast %235 : vector<8x128xf32> to vector<1x8x128xf32>
    tpu.vector_store %arg14[%c0_88, %c0_89, %c0_90], %238 {strides = array<i32>} : memref<1x8x128xf32, #tpu.memory_space<vmem>>, vector<1x8x128xf32>,
    return
  }
  func.func @transform_0(%arg0: i32, %arg1: i32) -> (i32, i32) {
    %c0_i32 = arith.constant 0 : i32
    %c0_i32_0 = arith.constant 0 : i32
    return %arg0, %c0_i32 : i32, i32
  }
  func.func @transform_1(%arg0: i32, %arg1: i32) -> (i32, i32) {
    %c0_i32 = arith.constant 0 : i32
    %c0_i32_0 = arith.constant 0 : i32
    return %arg0, %c0_i32 : i32, i32
  }
  func.func @transform_2(%arg0: i32, %arg1: i32) -> (i32, i32) {
    %c0_i32 = arith.constant 0 : i32
    %c0_i32_0 = arith.constant 0 : i32
    return %arg0, %c0_i32 : i32, i32
  }
  func.func @transform_3(%arg0: i32, %arg1: i32) -> (i32, i32) {
    %c0_i32 = arith.constant 0 : i32
    %c0_i32_0 = arith.constant 0 : i32
    %c0_i32_1 = arith.constant 0 : i32
    return %c0_i32, %c0_i32_0 : i32, i32
  }
  func.func @transform_4(%arg0: i32, %arg1: i32) -> (i32, i32) {
    %c0_i32 = arith.constant 0 : i32
    %c0_i32_0 = arith.constant 0 : i32
    %c0_i32_1 = arith.constant 0 : i32
    return %c0_i32, %c0_i32_0 : i32, i32
  }
  func.func @transform_5(%arg0: i32, %arg1: i32) -> (i32, i32) {
    %c0_i32 = arith.constant 0 : i32
    %c0_i32_0 = arith.constant 0 : i32
    %c0_i32_1 = arith.constant 0 : i32
    return %c0_i32, %c0_i32_0 : i32, i32
  }
  func.func @transform_6(%arg0: i32, %arg1: i32) -> (i32, i32) {
    %c0_i32 = arith.constant 0 : i32
    %c0_i32_0 = arith.constant 0 : i32
    %c0_i32_1 = arith.constant 0 : i32
    return %c0_i32, %c0_i32_0 : i32, i32
  }
  func.func @transform_7(%arg0: i32, %arg1: i32) -> (i32, i32) {
    %c0_i32 = arith.constant 0 : i32
    %c0_i32_0 = arith.constant 0 : i32
    %c0_i32_1 = arith.constant 0 : i32
    return %c0_i32, %c0_i32_0 : i32, i32
  }
  func.func @transform_8(%arg0: i32, %arg1: i32) -> (i32, i32) {
    %c0_i32 = arith.constant 0 : i32
    %c0_i32_0 = arith.constant 0 : i32
    %c0_i32_1 = arith.constant 0 : i32
    return %c0_i32, %c0_i32_0 : i32, i32
  }
  func.func @transform_9(%arg0: i32, %arg1: i32) -> (i32, i32) {
    %c0_i32 = arith.constant 0 : i32
    %c0_i32_0 = arith.constant 0 : i32
    %c0_i32_1 = arith.constant 0 : i32
    return %c0_i32, %c0_i32_0 : i32, i32
  }
  func.func @transform_10(%arg0: i32, %arg1: i32) -> (i32, i32) {
    %c0_i32 = arith.constant 0 : i32
    %c0_i32_0 = arith.constant 0 : i32
    %c0_i32_1 = arith.constant 0 : i32
    return %c0_i32, %c0_i32_0 : i32, i32
  }
  func.func @transform_11(%arg0: i32, %arg1: i32) -> (i32, i32) {
    %c0_i32 = arith.constant 0 : i32
    %c0_i32_0 = arith.constant 0 : i32
    %c0_i32_1 = arith.constant 0 : i32
    return %c0_i32, %c0_i32_0 : i32, i32
  }
  func.func @transform_12(%arg0: i32, %arg1: i32) -> (i32, i32, i32) {
    %c0_i32 = arith.constant 0 : i32
    %c0_i32_0 = arith.constant 0 : i32
    return %arg1, %arg0, %c0_i32 : i32, i32, i32
  }
  func.func @transform_13(%arg0: i32, %arg1: i32) -> (i32, i32, i32) {
    %c0_i32 = arith.constant 0 : i32
    %c0_i32_0 = arith.constant 0 : i32
    return %arg1, %arg0, %c0_i32 : i32, i32, i32
  }
}

</mosaic_0001>

<llo_original>
// kernel: tpu_custom_call.1
$region0: #{tpu_custom_call.1}
  #allocation0 [shape = 'u32[]', space=smem, size = 0x4, offset = 0x4, fixed_abs, tag = 'smem constant byte address 0x4 - core index']
  #allocation1 [shape = 'u32[144,128]{1,0:T(1,128)}', space=vmem, size = 0x12000, scoped, tag = 'internal scratch']
  #allocation2 [shape = 'f32[8,16]{1,0:T(8,128)}', space=vmem, size = 0x1000, scoped, tag = 'scratch operand']
  #allocation3 [shape = 'f32[8,16]{1,0:T(8,128)}', space=vmem, size = 0x1000, scoped, tag = 'scratch operand']
  #allocation4 [shape = 's32[8,1]{1,0:T(8,128)}', space=vmem, size = 0x1000, scoped, tag = 'scratch operand']
  %s0 = inlined_call_operand.vmem [shape: f32[8,128], index: 0, kind: input, shape index: {}]
  %s1 = inlined_call_operand.vmem [shape: s32[8,8], index: 1, kind: input, shape index: {}]
  %s2 = inlined_call_operand.vmem [shape: f32[8,16], index: 2, kind: input, shape index: {}]
  %s3 = inlined_call_operand.vmem [shape: f32[16,64], index: 3, kind: input, shape index: {}]
  %s4 = inlined_call_operand.vmem [shape: f32[1,64], index: 4, kind: input, shape index: {}]
  %s5 = inlined_call_operand.vmem [shape: f32[16,8], index: 5, kind: input, shape index: {}]
  %s6 = inlined_call_operand.vmem [shape: f32[40,48], index: 6, kind: input, shape index: {}]
  %s7 = inlined_call_operand.vmem [shape: f32[1,48], index: 7, kind: input, shape index: {}]
  %s8 = inlined_call_operand.vmem [shape: f32[16,144], index: 8, kind: input, shape index: {}]
  %s9 = inlined_call_operand.vmem [shape: f32[1,144], index: 9, kind: input, shape index: {}]
  %s10 = inlined_call_operand.vmem [shape: f32[16,128], index: 10, kind: input, shape index: {}]
  %s11 = inlined_call_operand.vmem [shape: f32[128,8], index: 11, kind: input, shape index: {}]
  %s12 = inlined_call_operand.hbm [shape: f32[5,8,128], index: 12, kind: output, shape index: {0}]
  %s13 = inlined_call_operand.hbm [shape: s32[5,8,128], index: 13, kind: output, shape index: {1}]
  %14 = xla_tuple %s12, %s13
  %s15 = sld [smem:[#allocation0]]
  $region93: #{tpu_custom_call.1} parent=0
    _
  %s17 = ssub.s32 1, %s15
  %s18 = scalar_select 0, %s17, %s15
  $region1: #{tpu_custom_call.1} parent=0
    #allocation5 [shape = 'u8[8192]{0}', space=vmem, size = 0x2000, scoped, tag = 'output window, operand 0']
    #allocation6 [shape = 's32[2]{0}', space=sflag, size = 0x8, scoped, tag = 'scoped memory for tpu_custom_call.1']
    #allocation7 [shape = 'u8[8192]{0}', space=vmem, size = 0x2000, scoped, tag = 'output window, operand 1']
    #allocation8 [shape = 's32[2]{0}', space=sflag, size = 0x8, scoped, tag = 'scoped memory for tpu_custom_call.1']
    %19 = vsyncpa [#allocation6], 0
    %s20 = scalar_lea.sflag [#allocation6], 1
    %21 = vsyncpa %s20, 0
    %22 = vsyncpa [#allocation8], 0
    %s23 = scalar_lea.sflag [#allocation8], 1
    %24 = vsyncpa %s23, 0
    loop: start=0, step=1, limit=7
    $region2: #{tpu_custom_call.1} parent=1 // loop_pre_header
      _
    $region3: #{tpu_custom_call.1} parent=1 // loop_header
      %s26 = sphi 0, %s30
      %p27 = scmp.ge.s32.totalorder %s26, 7
      %s33 = sphi 0, %s45
      %s34 = sphi 0, %s41
      %s35 = sphi 0, %s33
      %s36 = sphi 0, %s34
      %s37 = sphi 0, %s35
      %s38 = sphi 0, %s36
      %s48 = sphi 0, %s50
      %s51 = sphi 0, %s48
      %s52 = sphi 0, %s51
      %s68 = sphi 0, %s52
      %s74 = sphi 0, %s76
      %s77 = sphi 0, %s74
      %s78 = sphi 0, %s77
      %s94 = sphi 0, %s78
      %s100 = sphi 0, %s102
      %s103 = sphi 0, %s100
      %s104 = sphi 0, %s103
      %s120 = sphi 0, %s104
      %s124 = sphi 0, %s124
      %s126 = sphi 0, %s124
      %s127 = sphi 0, %s126
      %s141 = sphi 0, %s127
      %s145 = sphi 0, %s145
      %s147 = sphi 0, %s145
      %s148 = sphi 0, %s147
      %s162 = sphi 0, %s148
      %s166 = sphi 0, %s166
      %s168 = sphi 0, %s166
      %s169 = sphi 0, %s168
      %s183 = sphi 0, %s169
      %s187 = sphi 0, %s187
      %s189 = sphi 0, %s187
      %s190 = sphi 0, %s189
      %s204 = sphi 0, %s190
      %s208 = sphi 0, %s208
      %s210 = sphi 0, %s208
      %s211 = sphi 0, %s210
      %s225 = sphi 0, %s211
      %s229 = sphi 0, %s229
      %s231 = sphi 0, %s229
      %s232 = sphi 0, %s231
      %s246 = sphi 0, %s232
      %s250 = sphi 0, %s250
      %s252 = sphi 0, %s250
      %s253 = sphi 0, %s252
      %s267 = sphi 0, %s253
      %s271 = sphi 0, %s271
      %s273 = sphi 0, %s271
      %s274 = sphi 0, %s273
      %s288 = sphi 0, %s274
      %s292 = sphi 0, %s292
      %s294 = sphi 0, %s292
      %s295 = sphi 0, %s294
      %s309 = sphi 0, %s295
      %s317 = sphi 0, %s319
      %s320 = sphi 0, %s317
      %s321 = sphi 0, %s320
      %s337 = sphi 0, %s321
      %s345 = sphi 0, %s347
      %s348 = sphi 0, %s345
      %s349 = sphi 0, %s348
      %s365 = sphi 0, %s349
    $region4: #{tpu_custom_call.1} parent=1 // loop_header_branch
      %29 = sbr.rel (%p27) target = $region8
    $region5: #{tpu_custom_call.1} parent=1 // loop_body
      %s31 = ssub.s32 %s26, 1
      %s32 = ssub.s32 %s26, 2
      %s39 = sadd.s32 1, %s34
      %p40 = scmp.ge.s32.totalorder %s39, 5
      %s41 = scalar_select %p40, 0, %s39
      %s42 = sadd.s32 1, %s33
      %s43 = scalar_select %p40, %s42, %s33
      %p44 = scmp.ge.s32.totalorder %s43, 1
      %s45 = scalar_select %p44, 0, %s43
      %s46 = ssub.s32 %s33, %s45
      %p47 = scmp.eq.s32.totalorder %s46, 0
      %s49 = sadd.s32 %s48, 1
      %s50 = scalar_select %p47, %s48, %s49
      %p53 = pneg %p47
      %p54 = scmp.eq.s32.totalorder %s26, 4
      %p55 = por %p53, %p54
      %p56 = scmp.ne.s32.totalorder %s48, %s51
      %p57 = scmp.eq.s32.totalorder %s26, 0
      %p58 = por %p56, %p57
      %p59 = scmp.ne.s32.totalorder %s48, %s51
      %p60 = scmp.eq.s32.totalorder %s31, 4
      %p61 = por %p59, %p60
      %p62 = scmp.ne.s32.totalorder %s51, %s52
      %p63 = scmp.eq.s32.totalorder %s31, 0
      %p64 = por %p62, %p63
      %p65 = scmp.ne.s32.totalorder %s51, %s52
      %p66 = scmp.eq.s32.totalorder %s32, 4
      %p67 = por %p65, %p66
      %p69 = scmp.ne.s32.totalorder %s52, %s68
      %p70 = scmp.eq.s32.totalorder %s32, 0
      %p71 = por %p69, %p70
      %s72 = ssub.s32 %s33, %s45
      %p73 = scmp.eq.s32.totalorder %s72, 0
      %s75 = sadd.s32 %s74, 1
      %s76 = scalar_select %p73, %s74, %s75
      %p79 = pneg %p73
      %p80 = scmp.eq.s32.totalorder %s26, 4
      %p81 = por %p79, %p80
      %p82 = scmp.ne.s32.totalorder %s74, %s77
      %p83 = scmp.eq.s32.totalorder %s26, 0
      %p84 = por %p82, %p83
      %p85 = scmp.ne.s32.totalorder %s74, %s77
      %p86 = scmp.eq.s32.totalorder %s31, 4
      %p87 = por %p85, %p86
      %p88 = scmp.ne.s32.totalorder %s77, %s78
      %p89 = scmp.eq.s32.totalorder %s31, 0
      %p90 = por %p88, %p89
      %p91 = scmp.ne.s32.totalorder %s77, %s78
      %p92 = scmp.eq.s32.totalorder %s32, 4
      %p93 = por %p91, %p92
      %p95 = scmp.ne.s32.totalorder %s78, %s94
      %p96 = scmp.eq.s32.totalorder %s32, 0
      %p97 = por %p95, %p96
      %s98 = ssub.s32 %s33, %s45
      %p99 = scmp.eq.s32.totalorder %s98, 0
      %s101 = sadd.s32 %s100, 1
      %s102 = scalar_select %p99, %s100, %s101
      %p105 = pneg %p99
      %p106 = scmp.eq.s32.totalorder %s26, 4
      %p107 = por %p105, %p106
      %p108 = scmp.ne.s32.totalorder %s100, %s103
      %p109 = scmp.eq.s32.totalorder %s26, 0
      %p110 = por %p108, %p109
      %p111 = scmp.ne.s32.totalorder %s100, %s103
      %p112 = scmp.eq.s32.totalorder %s31, 4
      %p113 = por %p111, %p112
      %p114 = scmp.ne.s32.totalorder %s103, %s104
      %p115 = scmp.eq.s32.totalorder %s31, 0
      %p116 = por %p114, %p115
      %p117 = scmp.ne.s32.totalorder %s103, %s104
      %p118 = scmp.eq.s32.totalorder %s32, 4
      %p119 = por %p117, %p118
      %p121 = scmp.ne.s32.totalorder %s104, %s120
      %p122 = scmp.eq.s32.totalorder %s32, 0
      %p123 = por %p121, %p122
      %s125 = sadd.s32 %s124, 1
      %p128 = scmp.eq.s32.totalorder %s26, 4
      %p129 = scmp.ne.s32.totalorder %s124, %s126
      %p130 = scmp.eq.s32.totalorder %s26, 0
      %p131 = por %p129, %p130
      %p132 = scmp.ne.s32.totalorder %s124, %s126
      %p133 = scmp.eq.s32.totalorder %s31, 4
      %p134 = por %p132, %p133
      %p135 = scmp.ne.s32.totalorder %s126, %s127
      %p136 = scmp.eq.s32.totalorder %s31, 0
      %p137 = por %p135, %p136
      %p138 = scmp.ne.s32.totalorder %s126, %s127
      %p139 = scmp.eq.s32.totalorder %s32, 4
      %p140 = por %p138, %p139
      %p142 = scmp.ne.s32.totalorder %s127, %s141
      %p143 = scmp.eq.s32.totalorder %s32, 0
      %p144 = por %p142, %p143
      %s146 = sadd.s32 %s145, 1
      %p149 = scmp.eq.s32.totalorder %s26, 4
      %p150 = scmp.ne.s32.totalorder %s145, %s147
      %p151 = scmp.eq.s32.totalorder %s26, 0
      %p152 = por %p150, %p151
      %p153 = scmp.ne.s32.totalorder %s145, %s147
      %p154 = scmp.eq.s32.totalorder %s31, 4
      %p155 = por %p153, %p154
      %p156 = scmp.ne.s32.totalorder %s147, %s148
      %p157 = scmp.eq.s32.totalorder %s31, 0
      %p158 = por %p156, %p157
      %p159 = scmp.ne.s32.totalorder %s147, %s148
      %p160 = scmp.eq.s32.totalorder %s32, 4
      %p161 = por %p159, %p160
      %p163 = scmp.ne.s32.totalorder %s148, %s162
      %p164 = scmp.eq.s32.totalorder %s32, 0
      %p165 = por %p163, %p164
      %s167 = sadd.s32 %s166, 1
      %p170 = scmp.eq.s32.totalorder %s26, 4
      %p171 = scmp.ne.s32.totalorder %s166, %s168
      %p172 = scmp.eq.s32.totalorder %s26, 0
      %p173 = por %p171, %p172
      %p174 = scmp.ne.s32.totalorder %s166, %s168
      %p175 = scmp.eq.s32.totalorder %s31, 4
      %p176 = por %p174, %p175
      %p177 = scmp.ne.s32.totalorder %s168, %s169
      %p178 = scmp.eq.s32.totalorder %s31, 0
      %p179 = por %p177, %p178
      %p180 = scmp.ne.s32.totalorder %s168, %s169
      %p181 = scmp.eq.s32.totalorder %s32, 4
      %p182 = por %p180, %p181
      %p184 = scmp.ne.s32.totalorder %s169, %s183
      %p185 = scmp.eq.s32.totalorder %s32, 0
      %p186 = por %p184, %p185
      %s188 = sadd.s32 %s187, 1
      %p191 = scmp.eq.s32.totalorder %s26, 4
      %p192 = scmp.ne.s32.totalorder %s187, %s189
      %p193 = scmp.eq.s32.totalorder %s26, 0
      %p194 = por %p192, %p193
      %p195 = scmp.ne.s32.totalorder %s187, %s189
      %p196 = scmp.eq.s32.totalorder %s31, 4
      %p197 = por %p195, %p196
      %p198 = scmp.ne.s32.totalorder %s189, %s190
      %p199 = scmp.eq.s32.totalorder %s31, 0
      %p200 = por %p198, %p199
      %p201 = scmp.ne.s32.totalorder %s189, %s190
      %p202 = scmp.eq.s32.totalorder %s32, 4
      %p203 = por %p201, %p202
      %p205 = scmp.ne.s32.totalorder %s190, %s204
      %p206 = scmp.eq.s32.totalorder %s32, 0
      %p207 = por %p205, %p206
      %s209 = sadd.s32 %s208, 1
      %p212 = scmp.eq.s32.totalorder %s26, 4
      %p213 = scmp.ne.s32.totalorder %s208, %s210
      %p214 = scmp.eq.s32.totalorder %s26, 0
      %p215 = por %p213, %p214
      %p216 = scmp.ne.s32.totalorder %s208, %s210
      %p217 = scmp.eq.s32.totalorder %s31, 4
      %p218 = por %p216, %p217
      %p219 = scmp.ne.s32.totalorder %s210, %s211
      %p220 = scmp.eq.s32.totalorder %s31, 0
      %p221 = por %p219, %p220
      %p222 = scmp.ne.s32.totalorder %s210, %s211
      %p223 = scmp.eq.s32.totalorder %s32, 4
      %p224 = por %p222, %p223
      %p226 = scmp.ne.s32.totalorder %s211, %s225
      %p227 = scmp.eq.s32.totalorder %s32, 0
      %p228 = por %p226, %p227
      %s230 = sadd.s32 %s229, 1
      %p233 = scmp.eq.s32.totalorder %s26, 4
      %p234 = scmp.ne.s32.totalorder %s229, %s231
      %p235 = scmp.eq.s32.totalorder %s26, 0
      %p236 = por %p234, %p235
      %p237 = scmp.ne.s32.totalorder %s229, %s231
      %p238 = scmp.eq.s32.totalorder %s31, 4
      %p239 = por %p237, %p238
      %p240 = scmp.ne.s32.totalorder %s231, %s232
      %p241 = scmp.eq.s32.totalorder %s31, 0
      %p242 = por %p240, %p241
      %p243 = scmp.ne.s32.totalorder %s231, %s232
      %p244 = scmp.eq.s32.totalorder %s32, 4
      %p245 = por %p243, %p244
      %p247 = scmp.ne.s32.totalorder %s232, %s246
      %p248 = scmp.eq.s32.totalorder %s32, 0
      %p249 = por %p247, %p248
      %s251 = sadd.s32 %s250, 1
      %p254 = scmp.eq.s32.totalorder %s26, 4
      %p255 = scmp.ne.s32.totalorder %s250, %s252
      %p256 = scmp.eq.s32.totalorder %s26, 0
      %p257 = por %p255, %p256
      %p258 = scmp.ne.s32.totalorder %s250, %s252
      %p259 = scmp.eq.s32.totalorder %s31, 4
      %p260 = por %p258, %p259
      %p261 = scmp.ne.s32.totalorder %s252, %s253
      %p262 = scmp.eq.s32.totalorder %s31, 0
      %p263 = por %p261, %p262
      %p264 = scmp.ne.s32.totalorder %s252, %s253
      %p265 = scmp.eq.s32.totalorder %s32, 4
      %p266 = por %p264, %p265
      %p268 = scmp.ne.s32.totalorder %s253, %s267
      %p269 = scmp.eq.s32.totalorder %s32, 0
      %p270 = por %p268, %p269
      %s272 = sadd.s32 %s271, 1
      %p275 = scmp.eq.s32.totalorder %s26, 4
      %p276 = scmp.ne.s32.totalorder %s271, %s273
      %p277 = scmp.eq.s32.totalorder %s26, 0
      %p278 = por %p276, %p277
      %p279 = scmp.ne.s32.totalorder %s271, %s273
      %p280 = scmp.eq.s32.totalorder %s31, 4
      %p281 = por %p279, %p280
      %p282 = scmp.ne.s32.totalorder %s273, %s274
      %p283 = scmp.eq.s32.totalorder %s31, 0
      %p284 = por %p282, %p283
      %p285 = scmp.ne.s32.totalorder %s273, %s274
      %p286 = scmp.eq.s32.totalorder %s32, 4
      %p287 = por %p285, %p286
      %p289 = scmp.ne.s32.totalorder %s274, %s288
      %p290 = scmp.eq.s32.totalorder %s32, 0
      %p291 = por %p289, %p290
      %s293 = sadd.s32 %s292, 1
      %p296 = scmp.eq.s32.totalorder %s26, 4
      %p297 = scmp.ne.s32.totalorder %s292, %s294
      %p298 = scmp.eq.s32.totalorder %s26, 0
      %p299 = por %p297, %p298
      %p300 = scmp.ne.s32.totalorder %s292, %s294
      %p301 = scmp.eq.s32.totalorder %s31, 4
      %p302 = por %p300, %p301
      %p303 = scmp.ne.s32.totalorder %s294, %s295
      %p304 = scmp.eq.s32.totalorder %s31, 0
      %p305 = por %p303, %p304
      %p306 = scmp.ne.s32.totalorder %s294, %s295
      %p307 = scmp.eq.s32.totalorder %s32, 4
      %p308 = por %p306, %p307
      %p310 = scmp.ne.s32.totalorder %s295, %s309
      %p311 = scmp.eq.s32.totalorder %s32, 0
      %p312 = por %p310, %p311
      %s313 = ssub.s32 %s34, %s41
      %s314 = ssub.s32 %s33, %s45
      %s315 = sor.u32 %s313, %s314
      %p316 = scmp.eq.s32.totalorder %s315, 0
      %s318 = sadd.s32 %s317, 1
      %s319 = scalar_select %p316, %s317, %s318
      %p322 = pneg %p316
      %p323 = scmp.eq.s32.totalorder %s26, 4
      %p324 = por %p322, %p323
      %p325 = scmp.ne.s32.totalorder %s317, %s320
      %p326 = scmp.eq.s32.totalorder %s26, 0
      %p327 = por %p325, %p326
      %p328 = scmp.ne.s32.totalorder %s317, %s320
      %p329 = scmp.eq.s32.totalorder %s31, 4
      %p330 = por %p328, %p329
      %p331 = scmp.ne.s32.totalorder %s320, %s321
      %p332 = scmp.eq.s32.totalorder %s31, 0
      %p333 = por %p331, %p332
      %p334 = scmp.ne.s32.totalorder %s320, %s321
      %p335 = scmp.eq.s32.totalorder %s32, 4
      %p336 = por %p334, %p335
      %p338 = scmp.ne.s32.totalorder %s321, %s337
      %p339 = scmp.eq.s32.totalorder %s32, 0
      %p340 = por %p338, %p339
      %s341 = ssub.s32 %s34, %s41
      %s342 = ssub.s32 %s33, %s45
      %s343 = sor.u32 %s341, %s342
      %p344 = scmp.eq.s32.totalorder %s343, 0
      %s346 = sadd.s32 %s345, 1
      %s347 = scalar_select %p344, %s345, %s346
      %p350 = pneg %p344
      %p351 = scmp.eq.s32.totalorder %s26, 4
      %p352 = por %p350, %p351
      %p353 = scmp.ne.s32.totalorder %s345, %s348
      %p354 = scmp.eq.s32.totalorder %s26, 0
      %p355 = por %p353, %p354
      %p356 = scmp.ne.s32.totalorder %s345, %s348
      %p357 = scmp.eq.s32.totalorder %s31, 4
      %p358 = por %p356, %p357
      %p359 = scmp.ne.s32.totalorder %s348, %s349
      %p360 = scmp.eq.s32.totalorder %s31, 0
      %p361 = por %p359, %p360
      %p362 = scmp.ne.s32.totalorder %s348, %s349
      %p363 = scmp.eq.s32.totalorder %s32, 4
      %p364 = por %p362, %p363
      %p366 = scmp.ne.s32.totalorder %s349, %s365
      %p367 = scmp.eq.s32.totalorder %s32, 0
      %p368 = por %p366, %p367
      %p369 = scmp.le.s32.totalorder 1, %s26
      %p370 = scmp.lt.s32.totalorder %s26, 6
      %p371 = pnand %p369, %p370
      %p372 = pneg %p371
      // Predicated region
      $region9: #{tpu_custom_call.1} parent=5 // pred_check
        _
      $region10: #{tpu_custom_call.1} parent=5 // pred_check_branch
        %374 = sbr.rel (%p371) target = $region12
      $region11: #{tpu_custom_call.1} parent=5 // pred_region
        %s375 = ssub.s32 %s26, 1
        // Predicated region
        $region13: #{tpu_custom_call.1} parent=11 // pred_check
          %p376 = pneg %p64
        $region14: #{tpu_custom_call.1} parent=11 // pred_check_branch
          %378 = sbr.rel (%p376) target = $region16
        $region15: #{tpu_custom_call.1} parent=11 // pred_region
          %p379 = scmp.lt.s32.totalorder %s35, 0
          %s380 = scalar_select %p379, %s35, 0
          %s381 = smul.addr %s380, 8
          %s382 = scalar_lea.vmem %s0, %s381
        $region16: #{tpu_custom_call.1} parent=11 // pred_fallthru
          _
        // Predicated region
        $region17: #{tpu_custom_call.1} parent=11 // pred_check
          %p383 = pneg %p90
        $region18: #{tpu_custom_call.1} parent=11 // pred_check_branch
          %385 = sbr.rel (%p383) target = $region20
        $region19: #{tpu_custom_call.1} parent=11 // pred_region
          %p386 = scmp.lt.s32.totalorder %s35, 0
          %s387 = scalar_select %p386, %s35, 0
          %s388 = smul.addr %s387, 8
          %s389 = scalar_lea.vmem %s1, %s388
        $region20: #{tpu_custom_call.1} parent=11 // pred_fallthru
          _
        // Predicated region
        $region21: #{tpu_custom_call.1} parent=11 // pred_check
          %p390 = pneg %p116
        $region22: #{tpu_custom_call.1} parent=11 // pred_check_branch
          %392 = sbr.rel (%p390) target = $region24
        $region23: #{tpu_custom_call.1} parent=11 // pred_region
          %p393 = scmp.lt.s32.totalorder %s35, 0
          %s394 = scalar_select %p393, %s35, 0
          %s395 = smul.addr %s394, 8
          %s396 = scalar_lea.vmem %s2, %s395
        $region24: #{tpu_custom_call.1} parent=11 // pred_fallthru
          _
        // Predicated region
        $region25: #{tpu_custom_call.1} parent=11 // pred_check
          %p397 = pneg %p137
        $region26: #{tpu_custom_call.1} parent=11 // pred_check_branch
          %399 = sbr.rel (%p397) target = $region28
        $region27: #{tpu_custom_call.1} parent=11 // pred_region
          _
        $region28: #{tpu_custom_call.1} parent=11 // pred_fallthru
          _
        // Predicated region
        $region29: #{tpu_custom_call.1} parent=11 // pred_check
          %p400 = pneg %p158
        $region30: #{tpu_custom_call.1} parent=11 // pred_check_branch
          %402 = sbr.rel (%p400) target = $region32
        $region31: #{tpu_custom_call.1} parent=11 // pred_region
          _
        $region32: #{tpu_custom_call.1} parent=11 // pred_fallthru
          _
        // Predicated region
        $region33: #{tpu_custom_call.1} parent=11 // pred_check
          %p403 = pneg %p179
        $region34: #{tpu_custom_call.1} parent=11 // pred_check_branch
          %405 = sbr.rel (%p403) target = $region36
        $region35: #{tpu_custom_call.1} parent=11 // pred_region
          _
        $region36: #{tpu_custom_call.1} parent=11 // pred_fallthru
          _
        // Predicated region
        $region37: #{tpu_custom_call.1} parent=11 // pred_check
          %p406 = pneg %p200
        $region38: #{tpu_custom_call.1} parent=11 // pred_check_branch
          %408 = sbr.rel (%p406) target = $region40
        $region39: #{tpu_custom_call.1} parent=11 // pred_region
          _
        $region40: #{tpu_custom_call.1} parent=11 // pred_fallthru
          _
        // Predicated region
        $region41: #{tpu_custom_call.1} parent=11 // pred_check
          %p409 = pneg %p221
        $region42: #{tpu_custom_call.1} parent=11 // pred_check_branch
          %411 = sbr.rel (%p409) target = $region44
        $region43: #{tpu_custom_call.1} parent=11 // pred_region
          _
        $region44: #{tpu_custom_call.1} parent=11 // pred_fallthru
          _
        // Predicated region
        $region45: #{tpu_custom_call.1} parent=11 // pred_check
          %p412 = pneg %p242
        $region46: #{tpu_custom_call.1} parent=11 // pred_check_branch
          %414 = sbr.rel (%p412) target = $region48
        $region47: #{tpu_custom_call.1} parent=11 // pred_region
          _
        $region48: #{tpu_custom_call.1} parent=11 // pred_fallthru
          _
        // Predicated region
        $region49: #{tpu_custom_call.1} parent=11 // pred_check
          %p415 = pneg %p263
        $region50: #{tpu_custom_call.1} parent=11 // pred_check_branch
          %417 = sbr.rel (%p415) target = $region52
        $region51: #{tpu_custom_call.1} parent=11 // pred_region
          _
        $region52: #{tpu_custom_call.1} parent=11 // pred_fallthru
          _
        // Predicated region
        $region53: #{tpu_custom_call.1} parent=11 // pred_check
          %p418 = pneg %p284
        $region54: #{tpu_custom_call.1} parent=11 // pred_check_branch
          %420 = sbr.rel (%p418) target = $region56
        $region55: #{tpu_custom_call.1} parent=11 // pred_region
          _
        $region56: #{tpu_custom_call.1} parent=11 // pred_fallthru
          _
        // Predicated region
        $region57: #{tpu_custom_call.1} parent=11 // pred_check
          %p421 = pneg %p305
        $region58: #{tpu_custom_call.1} parent=11 // pred_check_branch
          %423 = sbr.rel (%p421) target = $region60
        $region59: #{tpu_custom_call.1} parent=11 // pred_region
          _
        $region60: #{tpu_custom_call.1} parent=11 // pred_fallthru
          _
      $region12: #{tpu_custom_call.1} parent=5 // pred_fallthru
        _
      %p424 = scmp.lt.s32.totalorder %s26, 5
      // Predicated region
      $region61: #{tpu_custom_call.1} parent=5 // pred_check
        %p425 = pneg %p424
      $region62: #{tpu_custom_call.1} parent=5 // pred_check_branch
        %427 = sbr.rel (%p425) target = $region64
      $region63: #{tpu_custom_call.1} parent=5 // pred_region
        _
      $region64: #{tpu_custom_call.1} parent=5 // pred_fallthru
        _
      %p428 = scmp.le.s32.totalorder 1, %s26
      %p429 = scmp.lt.s32.totalorder %s26, 6
      %p430 = pnand %p428, %p429
      %p431 = pneg %p430
      // Predicated region
      $region65: #{tpu_custom_call.1} parent=5 // pred_check
        _
      $region66: #{tpu_custom_call.1} parent=5 // pred_check_branch
        %433 = sbr.rel (%p430) target = $region68
      $region67: #{tpu_custom_call.1} parent=5 // pred_region
        %s434 = ssub.s32 %s26, 1
        %p435 = scmp.lt.s32.totalorder %s35, 0
        %s436 = scalar_select %p435, %s35, 0
        %s437 = smul.addr %s436, 8
        %s438 = scalar_lea.vmem %s0, %s437
        %p439 = pneg %p64
        %p440 = pneg %p61
        %p441 = scmp.lt.s32.totalorder %s35, 0
        %s442 = scalar_select %p441, %s35, 0
        %s443 = smul.addr %s442, 8
        %s444 = scalar_lea.vmem %s1, %s443
        %p445 = pneg %p90
        %p446 = pneg %p87
        %p447 = scmp.lt.s32.totalorder %s35, 0
        %s448 = scalar_select %p447, %s35, 0
        %s449 = smul.addr %s448, 8
        %s450 = scalar_lea.vmem %s2, %s449
        %p451 = pneg %p116
        %p452 = pneg %p113
        %p453 = pneg %p137
        %p454 = pneg %p134
        %p455 = pneg %p158
        %p456 = pneg %p155
        %p457 = pneg %p179
        %p458 = pneg %p176
        %p459 = pneg %p200
        %p460 = pneg %p197
        %p461 = pneg %p221
        %p462 = pneg %p218
        %p463 = pneg %p242
        %p464 = pneg %p239
        %p465 = pneg %p263
        %p466 = pneg %p260
        %p467 = pneg %p284
        %p468 = pneg %p281
        %p469 = pneg %p305
        %p470 = pneg %p302
        %p471 = pneg %p333
        %p472 = pneg %p330
        %s473 = sand.u32 %s320, 1
        %s474 = scalar_lea.sflag [#allocation6], %s473
        %s475 = sand.u32 %s320, 1
        %s476 = smul.addr %s475, 8
        %s477 = scalar_lea.vmem [#allocation5], %s476
        %p478 = pneg %p361
        %p479 = pneg %p358
        %s480 = sand.u32 %s348, 1
        %s481 = scalar_lea.sflag [#allocation8], %s480
        %s482 = sand.u32 %s348, 1
        %s483 = smul.addr %s482, 8
        %s484 = scalar_lea.vmem [#allocation7], %s483
        %p485 = scmp.lt.s32.totalorder %s35, 0
        %s486 = scalar_select %p485, %s35, 0
        %s487 = smul.addr %s486, 8
        %s488 = scalar_lea.vmem %s0, %s487
        %p489 = scmp.lt.s32.totalorder %s35, 0
        %s490 = scalar_select %p489, %s35, 0
        %s491 = smul.addr %s490, 8
        %s492 = scalar_lea.vmem %s1, %s491
        %p493 = scmp.lt.s32.totalorder %s35, 0
        %s494 = scalar_select %p493, %s35, 0
        %s495 = smul.addr %s494, 8
        %s496 = scalar_lea.vmem %s2, %s495
        %p497 = scmp.eq.s32.totalorder %s36, 0
        // Predicated region
        $region69: #{tpu_custom_call.1} parent=67 // pred_check
          %p498 = pneg %p497
        $region70: #{tpu_custom_call.1} parent=67 // pred_check_branch
          %500 = sbr.rel (%p498) target = $region72
        $region71: #{tpu_custom_call.1} parent=67 // pred_region
          %v501 = vld [vmem:[%s496] sm:$0xff]
          %vm502 = vcmask 130048
          %503 = vst.msk [vmem:[#allocation2] sm:$0xff] %vm502, %v501
          %504 = vst.msk [vmem:[#allocation3] sm:$0xff] %vm502, 0.0
          %vm505 = vcmask 7168
          %506 = vst.msk [vmem:[#allocation4] sm:$0xff] %vm505, 1
        $region72: #{tpu_custom_call.1} parent=67 // pred_fallthru
          _
        %v507 = vld [vmem:[%s488] sm:$0xff]
        %v508 = vld [vmem:[%s492] sm:$0xff]
        %v509 = vld [vmem:[#allocation2] sm:$0xff]
        %v510 = vld [vmem:[#allocation3] sm:$0xff]
        %v511 = vld [vmem:[#allocation4] sm:$0xff]
        %v512 = vlaneseq
        %v513 = vand.u32 %v512, 127
        %v514 = vld [vmem:[%s3] sm:$0xff]
        %v515 = vld [vmem:[%s3 + $0x8] sm:$0xff]
        %v516 = vld [vmem:[%s4] sm:$0x1]
        %v518 = vlaneseq
        %v519 = vshrl.u32 %v518, 7
        %v520 = vsub.s32 0, %v519
        %v521 = vrot.slane %v516, %v520
        %vm523 = vcmask 130048
        %v525 = vsel %vm523, %v509, 0
        %527 = vmatprep.subr.mxu0 0.0
        %528 = vmatpush1.msra.mxu0 0.0
        %529 = vmatprep.subr.mxu0 0.0
        %530 = vmatpush1.msra.mxu0 0.0
        %531 = vmatprep.subr.mxu0 0.0
        %532 = vmatpush1.msra.mxu0 0.0
        %533 = vmatprep.subr.mxu0 0.0
        %534 = vmatpush1.msra.mxu0 0.0
        %535 = vmatprep.subr.mxu0 0.0
        %536 = vmatpush1.msra.mxu0 0.0
        %537 = vmatprep.subr.mxu0 0.0
        %538 = vmatpush1.msra.mxu0 0.0
        %539 = vmatprep.subr.mxu0 0.0
        %540 = vmatpush1.msra.mxu0 0.0
        %541 = vmatprep.subr.mxu0 0.0
        %542 = vmatpush1.msra.mxu0 0.0
        %543 = vmatprep.subr.mxu0 0.0
        %544 = vmatpush1.msra.mxu0 0.0
        %545 = vmatprep.subr.mxu0 0.0
        %546 = vmatpush1.msra.mxu0 0.0
        %547 = vmatprep.subr.mxu0 0.0
        %548 = vmatpush1.msra.mxu0 0.0
        %549 = vmatprep.subr.mxu0 0.0
        %550 = vmatpush1.msra.mxu0 0.0
        %551 = vmatprep.subr.mxu0 0.0
        %552 = vmatpush1.msra.mxu0 0.0
        %553 = vmatprep.subr.mxu0 0.0
        %554 = vmatpush1.msra.mxu0 0.0
        %555 = vmatprep.subr.mxu0 0.0
        %556 = vmatpush1.msra.mxu0 %v515
        %557 = vmatprep.subr.mxu0 0.0
        %558 = vmatpush1.msra.mxu0 %v514
        %559 = vmatprep.subr.mxu0 0.0
        %560 = vmatpush2.msra.mxu0 0.0
        %561 = vmatprep.subr.mxu0 0.0
        %562 = vmatpush2.msra.mxu0 0.0
        %563 = vmatprep.subr.mxu0 0.0
        %564 = vmatpush2.msra.mxu0 0.0
        %565 = vmatprep.subr.mxu0 0.0
        %566 = vmatpush2.msra.mxu0 0.0
        %567 = vmatprep.subr.mxu0 0.0
        %568 = vmatpush2.msra.mxu0 0.0
        %569 = vmatprep.subr.mxu0 0.0
        %570 = vmatpush2.msra.mxu0 0.0
        %571 = vmatprep.subr.mxu0 0.0
        %572 = vmatpush2.msra.mxu0 0.0
        %573 = vmatprep.subr.mxu0 0.0
        %574 = vmatpush2.msra.mxu0 0.0
        %575 = vmatprep.subr.mxu0 0.0
        %576 = vmatpush2.msra.mxu0 0.0
        %577 = vmatprep.subr.mxu0 0.0
        %578 = vmatpush2.msra.mxu0 0.0
        %579 = vmatprep.subr.mxu0 0.0
        %580 = vmatpush2.msra.mxu0 0.0
        %581 = vmatprep.subr.mxu0 0.0
        %582 = vmatpush2.msra.mxu0 0.0
        %583 = vmatprep.subr.mxu0 0.0
        %584 = vmatpush2.msra.mxu0 0.0
        %585 = vmatprep.subr.mxu0 0.0
        %586 = vmatpush2.msra.mxu0 0.0
        %587 = vmatprep.subr.mxu0 0.0
        %588 = vmatpush2.msra.mxu0 0.0
        %589 = vmatprep.subr.mxu0 0.0
        %590 = vmatpush2.msra.mxu0 0.0
        %591 = vmatprep.mubr.f32.mxu0 0.0
        %592 = vmatmul.mubr.f32.gmra.mxu0 %v525
        %v593 = vpop.f32.mrf.mxu0
        %v594 = vadd.f32 %v521, %v593
        %v595 = vpop.f32.mrf.mxu0
        %596 = vdwg.mxu0
        %v597 = vld [vmem:[%s10] sm:$0xff]
        %v598 = vld [vmem:[%s10 + $0x8] sm:$0xff]
        %v600 = vsel %vm523, %v594, 0
        %602 = vmatprep.subr.mxu0 0.0
        %603 = vmatpush1.msra.mxu0 0.0
        %604 = vmatprep.subr.mxu0 0.0
        %605 = vmatpush1.msra.mxu0 0.0
        %606 = vmatprep.subr.mxu0 0.0
        %607 = vmatpush1.msra.mxu0 0.0
        %608 = vmatprep.subr.mxu0 0.0
        %609 = vmatpush1.msra.mxu0 0.0
        %610 = vmatprep.subr.mxu0 0.0
        %611 = vmatpush1.msra.mxu0 0.0
        %612 = vmatprep.subr.mxu0 0.0
        %613 = vmatpush1.msra.mxu0 0.0
        %614 = vmatprep.subr.mxu0 0.0
        %615 = vmatpush1.msra.mxu0 0.0
        %616 = vmatprep.subr.mxu0 0.0
        %617 = vmatpush1.msra.mxu0 0.0
        %618 = vmatprep.subr.mxu0 0.0
        %619 = vmatpush1.msra.mxu0 0.0
        %620 = vmatprep.subr.mxu0 0.0
        %621 = vmatpush1.msra.mxu0 0.0
        %622 = vmatprep.subr.mxu0 0.0
        %623 = vmatpush1.msra.mxu0 0.0
        %624 = vmatprep.subr.mxu0 0.0
        %625 = vmatpush1.msra.mxu0 0.0
        %626 = vmatprep.subr.mxu0 0.0
        %627 = vmatpush1.msra.mxu0 0.0
        %628 = vmatprep.subr.mxu0 0.0
        %629 = vmatpush1.msra.mxu0 0.0
        %630 = vmatprep.subr.mxu0 0.0
        %631 = vmatpush1.msra.mxu0 %v598
        %632 = vmatprep.subr.mxu0 0.0
        %633 = vmatpush1.msra.mxu0 %v597
        %634 = vmatprep.subr.mxu0 0.0
        %635 = vmatpush2.msra.mxu0 0.0
        %636 = vmatprep.subr.mxu0 0.0
        %637 = vmatpush2.msra.mxu0 0.0
        %638 = vmatprep.subr.mxu0 0.0
        %639 = vmatpush2.msra.mxu0 0.0
        %640 = vmatprep.subr.mxu0 0.0
        %641 = vmatpush2.msra.mxu0 0.0
        %642 = vmatprep.subr.mxu0 0.0
        %643 = vmatpush2.msra.mxu0 0.0
        %644 = vmatprep.subr.mxu0 0.0
        %645 = vmatpush2.msra.mxu0 0.0
        %646 = vmatprep.subr.mxu0 0.0
        %647 = vmatpush2.msra.mxu0 0.0
        %648 = vmatprep.subr.mxu0 0.0
        %649 = vmatpush2.msra.mxu0 0.0
        %650 = vmatprep.subr.mxu0 0.0
        %651 = vmatpush2.msra.mxu0 0.0
        %652 = vmatprep.subr.mxu0 0.0
        %653 = vmatpush2.msra.mxu0 0.0
        %654 = vmatprep.subr.mxu0 0.0
        %655 = vmatpush2.msra.mxu0 0.0
        %656 = vmatprep.subr.mxu0 0.0
        %657 = vmatpush2.msra.mxu0 0.0
        %658 = vmatprep.subr.mxu0 0.0
        %659 = vmatpush2.msra.mxu0 0.0
        %660 = vmatprep.subr.mxu0 0.0
        %661 = vmatpush2.msra.mxu0 0.0
        %662 = vmatprep.subr.mxu0 0.0
        %663 = vmatpush2.msra.mxu0 0.0
        %664 = vmatprep.subr.mxu0 0.0
        %665 = vmatpush2.msra.mxu0 0.0
        %666 = vmatprep.mubr.f32.mxu0 0.0
        %667 = vmatmul.mubr.f32.gmra.mxu0 %v600
        %v668 = vpop.f32.mrf.mxu0
        %v669 = vadd.f32 0.0, %v668
        %v670 = vpop.f32.mrf.mxu0
        %671 = vdwg.mxu0
        %v672 = vmul.f32 %v507, %v669
        %v673 = vld [vmem:[%s11] sm:$0xff]
        %v674 = vld [vmem:[%s11 + $0x8] sm:$0xff]
        %v675 = vld [vmem:[%s11 + $0x10] sm:$0xff]
        %v676 = vld [vmem:[%s11 + $0x18] sm:$0xff]
        %v677 = vld [vmem:[%s11 + $0x20] sm:$0xff]
        %v678 = vld [vmem:[%s11 + $0x28] sm:$0xff]
        %v679 = vld [vmem:[%s11 + $0x30] sm:$0xff]
        %v680 = vld [vmem:[%s11 + $0x38] sm:$0xff]
        %v681 = vld [vmem:[%s11 + $0x40] sm:$0xff]
        %v682 = vld [vmem:[%s11 + $0x48] sm:$0xff]
        %v683 = vld [vmem:[%s11 + $0x50] sm:$0xff]
        %v684 = vld [vmem:[%s11 + $0x58] sm:$0xff]
        %v685 = vld [vmem:[%s11 + $0x60] sm:$0xff]
        %v686 = vld [vmem:[%s11 + $0x68] sm:$0xff]
        %v687 = vld [vmem:[%s11 + $0x70] sm:$0xff]
        %v688 = vld [vmem:[%s11 + $0x78] sm:$0xff]
        %689 = vmatprep.subr.mxu0 0.0
        %690 = vmatpush1.msra.mxu0 %v688
        %691 = vmatprep.subr.mxu0 0.0
        %692 = vmatpush1.msra.mxu0 %v687
        %693 = vmatprep.subr.mxu0 0.0
        %694 = vmatpush1.msra.mxu0 %v686
        %695 = vmatprep.subr.mxu0 0.0
        %696 = vmatpush1.msra.mxu0 %v685
        %697 = vmatprep.subr.mxu0 0.0
        %698 = vmatpush1.msra.mxu0 %v684
        %699 = vmatprep.subr.mxu0 0.0
        %700 = vmatpush1.msra.mxu0 %v683
        %701 = vmatprep.subr.mxu0 0.0
        %702 = vmatpush1.msra.mxu0 %v682
        %703 = vmatprep.subr.mxu0 0.0
        %704 = vmatpush1.msra.mxu0 %v681
        %705 = vmatprep.subr.mxu0 0.0
        %706 = vmatpush1.msra.mxu0 %v680
        %707 = vmatprep.subr.mxu0 0.0
        %708 = vmatpush1.msra.mxu0 %v679
        %709 = vmatprep.subr.mxu0 0.0
        %710 = vmatpush1.msra.mxu0 %v678
        %711 = vmatprep.subr.mxu0 0.0
        %712 = vmatpush1.msra.mxu0 %v677
        %713 = vmatprep.subr.mxu0 0.0
        %714 = vmatpush1.msra.mxu0 %v676
        %715 = vmatprep.subr.mxu0 0.0
        %716 = vmatpush1.msra.mxu0 %v675
        %717 = vmatprep.subr.mxu0 0.0
        %718 = vmatpush1.msra.mxu0 %v674
        %719 = vmatprep.subr.mxu0 0.0
        %720 = vmatpush1.msra.mxu0 %v673
        %721 = vmatprep.subr.mxu0 0.0
        %722 = vmatpush2.msra.mxu0 0.0
        %723 = vmatprep.subr.mxu0 0.0
        %724 = vmatpush2.msra.mxu0 0.0
        %725 = vmatprep.subr.mxu0 0.0
        %726 = vmatpush2.msra.mxu0 0.0
        %727 = vmatprep.subr.mxu0 0.0
        %728 = vmatpush2.msra.mxu0 0.0
        %729 = vmatprep.subr.mxu0 0.0
        %730 = vmatpush2.msra.mxu0 0.0
        %731 = vmatprep.subr.mxu0 0.0
        %732 = vmatpush2.msra.mxu0 0.0
        %733 = vmatprep.subr.mxu0 0.0
        %734 = vmatpush2.msra.mxu0 0.0
        %735 = vmatprep.subr.mxu0 0.0
        %736 = vmatpush2.msra.mxu0 0.0
        %737 = vmatprep.subr.mxu0 0.0
        %738 = vmatpush2.msra.mxu0 0.0
        %739 = vmatprep.subr.mxu0 0.0
        %740 = vmatpush2.msra.mxu0 0.0
        %741 = vmatprep.subr.mxu0 0.0
        %742 = vmatpush2.msra.mxu0 0.0
        %743 = vmatprep.subr.mxu0 0.0
        %744 = vmatpush2.msra.mxu0 0.0
        %745 = vmatprep.subr.mxu0 0.0
        %746 = vmatpush2.msra.mxu0 0.0
        %747 = vmatprep.subr.mxu0 0.0
        %748 = vmatpush2.msra.mxu0 0.0
        %749 = vmatprep.subr.mxu0 0.0
        %750 = vmatpush2.msra.mxu0 0.0
        %751 = vmatprep.subr.mxu0 0.0
        %752 = vmatpush2.msra.mxu0 0.0
        %753 = vmatprep.mubr.f32.mxu0 0.0
        %754 = vmatmul.mubr.f32.gmra.mxu0 %v672
        %v755 = vpop.f32.mrf.mxu0
        %v756 = vadd.f32 0.0, %v755
        %v757 = vpop.f32.mrf.mxu0
        %758 = vdwg.mxu0
        %vm759 = vcmask 64512
        %v760 = vsel %vm759, %v756, -inf
        %761 = vmax.xlane.f32.xlu0 %v760
        %v762 = vpop.xlane.xlu0 %761
        %v763 = vsub.f32 %v756, %v762
        %v764 = vmul.f32 %v763, 1.442695
        %v765 = vpow.pop %v764
        %v766 = vsel %vm759, %v765, 0.0
        %767 = vadd.xlane.f32.xlu0 %v766
        %v768 = vpop.xlane.xlu0 %767
        %v769 = vrcp.pop %v768
        %v770 = vmul.f32 %v765, %v769
        %v772 = vsel %vm759, %v770, 0
        %v775 = vsel %vm759, %v673, 0
        %v778 = vsel %vm759, %v674, 0
        %v781 = vsel %vm759, %v675, 0
        %v784 = vsel %vm759, %v676, 0
        %v787 = vsel %vm759, %v677, 0
        %v790 = vsel %vm759, %v678, 0
        %v793 = vsel %vm759, %v679, 0
        %v796 = vsel %vm759, %v680, 0
        %v799 = vsel %vm759, %v681, 0
        %v802 = vsel %vm759, %v682, 0
        %v805 = vsel %vm759, %v683, 0
        %v808 = vsel %vm759, %v684, 0
        %v811 = vsel %vm759, %v685, 0
        %v814 = vsel %vm759, %v686, 0
        %v817 = vsel %vm759, %v687, 0
        %v820 = vsel %vm759, %v688, 0
        %822 = vmatprep.subr.mxu0 0.0
        %823 = vmatpush1.xpose.msra.mxu0 %v820
        %824 = vmatprep.subr.mxu0 0.0
        %825 = vmatpush1.xpose.msra.mxu0 %v817
        %826 = vmatprep.subr.mxu0 0.0
        %827 = vmatpush1.xpose.msra.mxu0 %v814
        %828 = vmatprep.subr.mxu0 0.0
        %829 = vmatpush1.xpose.msra.mxu0 %v811
        %830 = vmatprep.subr.mxu0 0.0
        %831 = vmatpush1.xpose.msra.mxu0 %v808
        %832 = vmatprep.subr.mxu0 0.0
        %833 = vmatpush1.xpose.msra.mxu0 %v805
        %834 = vmatprep.subr.mxu0 0.0
        %835 = vmatpush1.xpose.msra.mxu0 %v802
        %836 = vmatprep.subr.mxu0 0.0
        %837 = vmatpush1.xpose.msra.mxu0 %v799
        %838 = vmatprep.subr.mxu0 0.0
        %839 = vmatpush1.xpose.msra.mxu0 %v796
        %840 = vmatprep.subr.mxu0 0.0
        %841 = vmatpush1.xpose.msra.mxu0 %v793
        %842 = vmatprep.subr.mxu0 0.0
        %843 = vmatpush1.xpose.msra.mxu0 %v790
        %844 = vmatprep.subr.mxu0 0.0
        %845 = vmatpush1.xpose.msra.mxu0 %v787
        %846 = vmatprep.subr.mxu0 0.0
        %847 = vmatpush1.xpose.msra.mxu0 %v784
        %848 = vmatprep.subr.mxu0 0.0
        %849 = vmatpush1.xpose.msra.mxu0 %v781
        %850 = vmatprep.subr.mxu0 0.0
        %851 = vmatpush1.xpose.msra.mxu0 %v778
        %852 = vmatprep.subr.mxu0 0.0
        %853 = vmatpush1.xpose.msra.mxu0 %v775
        %854 = vmatprep.subr.mxu0 0.0
        %855 = vmatpush2.xpose.msra.mxu0 0.0
        %856 = vmatprep.subr.mxu0 0.0
        %857 = vmatpush2.xpose.msra.mxu0 0.0
        %858 = vmatprep.subr.mxu0 0.0
        %859 = vmatpush2.xpose.msra.mxu0 0.0
        %860 = vmatprep.subr.mxu0 0.0
        %861 = vmatpush2.xpose.msra.mxu0 0.0
        %862 = vmatprep.subr.mxu0 0.0
        %863 = vmatpush2.xpose.msra.mxu0 0.0
        %864 = vmatprep.subr.mxu0 0.0
        %865 = vmatpush2.xpose.msra.mxu0 0.0
        %866 = vmatprep.subr.mxu0 0.0
        %867 = vmatpush2.xpose.msra.mxu0 0.0
        %868 = vmatprep.subr.mxu0 0.0
        %869 = vmatpush2.xpose.msra.mxu0 0.0
        %870 = vmatprep.subr.mxu0 0.0
        %871 = vmatpush2.xpose.msra.mxu0 0.0
        %872 = vmatprep.subr.mxu0 0.0
        %873 = vmatpush2.xpose.msra.mxu0 0.0
        %874 = vmatprep.subr.mxu0 0.0
        %875 = vmatpush2.xpose.msra.mxu0 0.0
        %876 = vmatprep.subr.mxu0 0.0
        %877 = vmatpush2.xpose.msra.mxu0 0.0
        %878 = vmatprep.subr.mxu0 0.0
        %879 = vmatpush2.xpose.msra.mxu0 0.0
        %880 = vmatprep.subr.mxu0 0.0
        %881 = vmatpush2.xpose.msra.mxu0 0.0
        %882 = vmatprep.subr.mxu0 0.0
        %883 = vmatpush2.xpose.msra.mxu0 0.0
        %884 = vmatprep.subr.mxu0 0.0
        %885 = vmatpush2.xpose.msra.mxu0 0.0
        %886 = vmatprep.mubr.f32.mxu0 0.0
        %887 = vmatmul.mubr.f32.gmra.mxu0 %v772
        %v888 = vpop.f32.mrf.mxu0
        %v889 = vadd.f32 0.0, %v888
        %v890 = vpop.f32.mrf.mxu0
        %891 = vdwg.mxu0
        %v892 = vmul.f32 %v889, %v507
        %893 = vmatprep.subr.mxu0 0.0
        %894 = vmatpush1.xpose.msra.mxu0 0.0
        %895 = vmatprep.subr.mxu0 0.0
        %896 = vmatpush1.xpose.msra.mxu0 0.0
        %897 = vmatprep.subr.mxu0 0.0
        %898 = vmatpush1.xpose.msra.mxu0 0.0
        %899 = vmatprep.subr.mxu0 0.0
        %900 = vmatpush1.xpose.msra.mxu0 0.0
        %901 = vmatprep.subr.mxu0 0.0
        %902 = vmatpush1.xpose.msra.mxu0 0.0
        %903 = vmatprep.subr.mxu0 0.0
        %904 = vmatpush1.xpose.msra.mxu0 0.0
        %905 = vmatprep.subr.mxu0 0.0
        %906 = vmatpush1.xpose.msra.mxu0 0.0
        %907 = vmatprep.subr.mxu0 0.0
        %908 = vmatpush1.xpose.msra.mxu0 0.0
        %909 = vmatprep.subr.mxu0 0.0
        %910 = vmatpush1.xpose.msra.mxu0 0.0
        %911 = vmatprep.subr.mxu0 0.0
        %912 = vmatpush1.xpose.msra.mxu0 0.0
        %913 = vmatprep.subr.mxu0 0.0
        %914 = vmatpush1.xpose.msra.mxu0 0.0
        %915 = vmatprep.subr.mxu0 0.0
        %916 = vmatpush1.xpose.msra.mxu0 0.0
        %917 = vmatprep.subr.mxu0 0.0
        %918 = vmatpush1.xpose.msra.mxu0 0.0
        %919 = vmatprep.subr.mxu0 0.0
        %920 = vmatpush1.xpose.msra.mxu0 0.0
        %921 = vmatprep.subr.mxu0 0.0
        %922 = vmatpush1.xpose.msra.mxu0 %v598
        %923 = vmatprep.subr.mxu0 0.0
        %924 = vmatpush1.xpose.msra.mxu0 %v597
        %925 = vmatprep.subr.mxu0 0.0
        %926 = vmatpush2.xpose.msra.mxu0 0.0
        %927 = vmatprep.subr.mxu0 0.0
        %928 = vmatpush2.xpose.msra.mxu0 0.0
        %929 = vmatprep.subr.mxu0 0.0
        %930 = vmatpush2.xpose.msra.mxu0 0.0
        %931 = vmatprep.subr.mxu0 0.0
        %932 = vmatpush2.xpose.msra.mxu0 0.0
        %933 = vmatprep.subr.mxu0 0.0
        %934 = vmatpush2.xpose.msra.mxu0 0.0
        %935 = vmatprep.subr.mxu0 0.0
        %936 = vmatpush2.xpose.msra.mxu0 0.0
        %937 = vmatprep.subr.mxu0 0.0
        %938 = vmatpush2.xpose.msra.mxu0 0.0
        %939 = vmatprep.subr.mxu0 0.0
        %940 = vmatpush2.xpose.msra.mxu0 0.0
        %941 = vmatprep.subr.mxu0 0.0
        %942 = vmatpush2.xpose.msra.mxu0 0.0
        %943 = vmatprep.subr.mxu0 0.0
        %944 = vmatpush2.xpose.msra.mxu0 0.0
        %945 = vmatprep.subr.mxu0 0.0
        %946 = vmatpush2.xpose.msra.mxu0 0.0
        %947 = vmatprep.subr.mxu0 0.0
        %948 = vmatpush2.xpose.msra.mxu0 0.0
        %949 = vmatprep.subr.mxu0 0.0
        %950 = vmatpush2.xpose.msra.mxu0 0.0
        %951 = vmatprep.subr.mxu0 0.0
        %952 = vmatpush2.xpose.msra.mxu0 0.0
        %953 = vmatprep.subr.mxu0 0.0
        %954 = vmatpush2.xpose.msra.mxu0 0.0
        %955 = vmatprep.subr.mxu0 0.0
        %956 = vmatpush2.xpose.msra.mxu0 0.0
        %957 = vmatprep.mubr.f32.mxu0 0.0
        %958 = vmatmul.mubr.f32.gmra.mxu0 %v892
        %v959 = vpop.f32.mrf.mxu0
        %v960 = vadd.f32 0.0, %v959
        %v961 = vpop.f32.mrf.mxu0
        %962 = vdwg.mxu0
        %vm963 = vcmp.ge.s32.totalorder %v511, 16
        %v964 = vsel %vm963, 3, %v511
        %965 = vset.pattern.permute.xlu0 0
        %966 = vperm.xlu0 %965, %v964
        %v967 = vpop.permute.xlu0 %966
        %vm968 = vcmp.eq.s32.totalorder %v513, %v967
        %v969 = vsel %vm968, 1, 0
        %v970 = vcvt.s32.f32 %v969
        %v971 = vld [vmem:[%s5] sm:$0xff]
        %v972 = vld [vmem:[%s5 + $0x8] sm:$0xff]
        %v974 = vsel %vm523, %v970, 0
        %976 = vmatprep.subr.mxu0 0.0
        %977 = vmatpush1.msra.mxu0 0.0
        %978 = vmatprep.subr.mxu0 0.0
        %979 = vmatpush1.msra.mxu0 0.0
        %980 = vmatprep.subr.mxu0 0.0
        %981 = vmatpush1.msra.mxu0 0.0
        %982 = vmatprep.subr.mxu0 0.0
        %983 = vmatpush1.msra.mxu0 0.0
        %984 = vmatprep.subr.mxu0 0.0
        %985 = vmatpush1.msra.mxu0 0.0
        %986 = vmatprep.subr.mxu0 0.0
        %987 = vmatpush1.msra.mxu0 0.0
        %988 = vmatprep.subr.mxu0 0.0
        %989 = vmatpush1.msra.mxu0 0.0
        %990 = vmatprep.subr.mxu0 0.0
        %991 = vmatpush1.msra.mxu0 0.0
        %992 = vmatprep.subr.mxu0 0.0
        %993 = vmatpush1.msra.mxu0 0.0
        %994 = vmatprep.subr.mxu0 0.0
        %995 = vmatpush1.msra.mxu0 0.0
        %996 = vmatprep.subr.mxu0 0.0
        %997 = vmatpush1.msra.mxu0 0.0
        %998 = vmatprep.subr.mxu0 0.0
        %999 = vmatpush1.msra.mxu0 0.0
        %1000 = vmatprep.subr.mxu0 0.0
        %1001 = vmatpush1.msra.mxu0 0.0
        %1002 = vmatprep.subr.mxu0 0.0
        %1003 = vmatpush1.msra.mxu0 0.0
        %1004 = vmatprep.subr.mxu0 0.0
        %1005 = vmatpush1.msra.mxu0 %v972
        %1006 = vmatprep.subr.mxu0 0.0
        %1007 = vmatpush1.msra.mxu0 %v971
        %1008 = vmatprep.subr.mxu0 0.0
        %1009 = vmatpush2.msra.mxu0 0.0
        %1010 = vmatprep.subr.mxu0 0.0
        %1011 = vmatpush2.msra.mxu0 0.0
        %1012 = vmatprep.subr.mxu0 0.0
        %1013 = vmatpush2.msra.mxu0 0.0
        %1014 = vmatprep.subr.mxu0 0.0
        %1015 = vmatpush2.msra.mxu0 0.0
        %1016 = vmatprep.subr.mxu0 0.0
        %1017 = vmatpush2.msra.mxu0 0.0
        %1018 = vmatprep.subr.mxu0 0.0
        %1019 = vmatpush2.msra.mxu0 0.0
        %1020 = vmatprep.subr.mxu0 0.0
        %1021 = vmatpush2.msra.mxu0 0.0
        %1022 = vmatprep.subr.mxu0 0.0
        %1023 = vmatpush2.msra.mxu0 0.0
        %1024 = vmatprep.subr.mxu0 0.0
        %1025 = vmatpush2.msra.mxu0 0.0
        %1026 = vmatprep.subr.mxu0 0.0
        %1027 = vmatpush2.msra.mxu0 0.0
        %1028 = vmatprep.subr.mxu0 0.0
        %1029 = vmatpush2.msra.mxu0 0.0
        %1030 = vmatprep.subr.mxu0 0.0
        %1031 = vmatpush2.msra.mxu0 0.0
        %1032 = vmatprep.subr.mxu0 0.0
        %1033 = vmatpush2.msra.mxu0 0.0
        %1034 = vmatprep.subr.mxu0 0.0
        %1035 = vmatpush2.msra.mxu0 0.0
        %1036 = vmatprep.subr.mxu0 0.0
        %1037 = vmatpush2.msra.mxu0 0.0
        %1038 = vmatprep.subr.mxu0 0.0
        %1039 = vmatpush2.msra.mxu0 0.0
        %1040 = vmatprep.mubr.f32.mxu0 0.0
        %1041 = vmatmul.mubr.f32.gmra.mxu0 %v974
        %v1042 = vpop.f32.mrf.mxu0
        %v1043 = vadd.f32 0.0, %v1042
        %v1044 = vpop.f32.mrf.mxu0
        %1045 = vdwg.mxu0
        %1047 = vrot.lane.b32.xlu0 %v510, 16
        %v1048 = vpop.permute.xlu0 %1047
        %1051 = vrot.lane.b32.xlu0 %v1043, 32
        %v1052 = vpop.permute.xlu0 %1051
        %v1054 = vsel %vm523, %v960, %v1048
        %vm1055 = vcmask 261120
        %v1056 = vsel %vm1055, %v1054, %v1052
        %v1057 = vld [vmem:[%s6] sm:$0xff]
        %v1058 = vld [vmem:[%s6 + $0x8] sm:$0xff]
        %v1059 = vld [vmem:[%s6 + $0x10] sm:$0xff]
        %v1060 = vld [vmem:[%s6 + $0x18] sm:$0xff]
        %v1061 = vld [vmem:[%s6 + $0x20] sm:$0xff]
        %v1062 = vld [vmem:[%s7] sm:$0x1]
        %v1064 = vlaneseq
        %v1065 = vshrl.u32 %v1064, 7
        %v1066 = vsub.s32 0, %v1065
        %v1067 = vrot.slane %v1062, %v1066
        %vm1069 = vcmask 326656
        %v1071 = vsel %vm1069, %v1056, 0
        %1073 = vmatprep.subr.mxu0 0.0
        %1074 = vmatpush1.msra.mxu0 0.0
        %1075 = vmatprep.subr.mxu0 0.0
        %1076 = vmatpush1.msra.mxu0 0.0
        %1077 = vmatprep.subr.mxu0 0.0
        %1078 = vmatpush1.msra.mxu0 0.0
        %1079 = vmatprep.subr.mxu0 0.0
        %1080 = vmatpush1.msra.mxu0 0.0
        %1081 = vmatprep.subr.mxu0 0.0
        %1082 = vmatpush1.msra.mxu0 0.0
        %1083 = vmatprep.subr.mxu0 0.0
        %1084 = vmatpush1.msra.mxu0 0.0
        %1085 = vmatprep.subr.mxu0 0.0
        %1086 = vmatpush1.msra.mxu0 0.0
        %1087 = vmatprep.subr.mxu0 0.0
        %1088 = vmatpush1.msra.mxu0 0.0
        %1089 = vmatprep.subr.mxu0 0.0
        %1090 = vmatpush1.msra.mxu0 0.0
        %1091 = vmatprep.subr.mxu0 0.0
        %1092 = vmatpush1.msra.mxu0 0.0
        %1093 = vmatprep.subr.mxu0 0.0
        %1094 = vmatpush1.msra.mxu0 0.0
        %1095 = vmatprep.subr.mxu0 0.0
        %1096 = vmatpush1.msra.mxu0 %v1061
        %1097 = vmatprep.subr.mxu0 0.0
        %1098 = vmatpush1.msra.mxu0 %v1060
        %1099 = vmatprep.subr.mxu0 0.0
        %1100 = vmatpush1.msra.mxu0 %v1059
        %1101 = vmatprep.subr.mxu0 0.0
        %1102 = vmatpush1.msra.mxu0 %v1058
        %1103 = vmatprep.subr.mxu0 0.0
        %1104 = vmatpush1.msra.mxu0 %v1057
        %1105 = vmatprep.subr.mxu0 0.0
        %1106 = vmatpush2.msra.mxu0 0.0
        %1107 = vmatprep.subr.mxu0 0.0
        %1108 = vmatpush2.msra.mxu0 0.0
        %1109 = vmatprep.subr.mxu0 0.0
        %1110 = vmatpush2.msra.mxu0 0.0
        %1111 = vmatprep.subr.mxu0 0.0
        %1112 = vmatpush2.msra.mxu0 0.0
        %1113 = vmatprep.subr.mxu0 0.0
        %1114 = vmatpush2.msra.mxu0 0.0
        %1115 = vmatprep.subr.mxu0 0.0
        %1116 = vmatpush2.msra.mxu0 0.0
        %1117 = vmatprep.subr.mxu0 0.0
        %1118 = vmatpush2.msra.mxu0 0.0
        %1119 = vmatprep.subr.mxu0 0.0
        %1120 = vmatpush2.msra.mxu0 0.0
        %1121 = vmatprep.subr.mxu0 0.0
        %1122 = vmatpush2.msra.mxu0 0.0
        %1123 = vmatprep.subr.mxu0 0.0
        %1124 = vmatpush2.msra.mxu0 0.0
        %1125 = vmatprep.subr.mxu0 0.0
        %1126 = vmatpush2.msra.mxu0 0.0
        %1127 = vmatprep.subr.mxu0 0.0
        %1128 = vmatpush2.msra.mxu0 0.0
        %1129 = vmatprep.subr.mxu0 0.0
        %1130 = vmatpush2.msra.mxu0 0.0
        %1131 = vmatprep.subr.mxu0 0.0
        %1132 = vmatpush2.msra.mxu0 0.0
        %1133 = vmatprep.subr.mxu0 0.0
        %1134 = vmatpush2.msra.mxu0 0.0
        %1135 = vmatprep.subr.mxu0 0.0
        %1136 = vmatpush2.msra.mxu0 0.0
        %1137 = vmatprep.mubr.f32.mxu0 0.0
        %1138 = vmatmul.mubr.f32.gmra.mxu0 %v1071
        %v1139 = vpop.f32.mrf.mxu0
        %v1140 = vadd.f32 %v1067, %v1139
        %v1141 = vpop.f32.mrf.mxu0
        %1142 = vdwg.mxu0
        %1143 = vrot.lane.b32.xlu0 %v594, 112
        %v1144 = vpop.permute.xlu0 %1143
        %v1146 = vadd.f32 %v1140, %v1144
        %v1147 = vxor.u32 %v1146, 2147483648
        %v1148 = vmul.f32 %v1147, 1.442695
        %v1149 = vpow.pop %v1148
        %v1150 = vadd.f32 %v1149, 1.0
        %v1151 = vrcp.pop %v1150
        %v1152 = vmul.f32 1.0, %v1151
        %1153 = vrot.lane.b32.xlu0 %v594, 80
        %v1154 = vpop.permute.xlu0 %1153
        %v1156 = vmul.f32 %v1152, %v1154
        %1158 = vrot.lane.b32.xlu0 %v1156, 32
        %v1159 = vpop.permute.xlu0 %1158
        %v1161 = vadd.f32 %v1140, %v1159
        %v1162 = vtanh.pop %v1161
        %v1163 = vsub.f32 1.0, %v1152
        %1165 = vrot.lane.b32.xlu0 %v1162, 112
        %v1166 = vpop.permute.xlu0 %1165
        %v1168 = vmul.f32 %v1163, %v1166
        %1169 = vrot.lane.b32.xlu0 %v509, 16
        %v1170 = vpop.permute.xlu0 %1169
        %v1172 = vmul.f32 %v1152, %v1170
        %v1173 = vadd.f32 %v1168, %v1172
        %v1174 = vld [vmem:[%s8] sm:$0xff]
        %v1175 = vld [vmem:[%s8 + $0x8] sm:$0xff]
        %v1176 = vld [vmem:[%s8 + $0x10] sm:$0xff]
        %v1177 = vld [vmem:[%s8 + $0x18] sm:$0xff]
        %v1178 = vld [vmem:[%s9] sm:$0x3]
        %v1180 = vlaneseq
        %v1181 = vshrl.u32 %v1180, 7
        %v1182 = vsub.s32 0, %v1181
        %v1183 = vrot.slane %v1178, %v1182
        %v1184 = vlaneseq
        %v1185 = vshrl.u32 %v1184, 7
        %v1186 = vsub.s32 1, %v1185
        %v1187 = vrot.slane %v1178, %v1186
        %1191 = vrot.lane.b32.xlu0 %v1173, 112
        %v1192 = vpop.permute.xlu0 %1191
        %v1193 = vsel %vm523, %v1192, 0
        %1195 = vmatprep.subr.mxu0 0.0
        %1196 = vmatpush1.msra.mxu0 0.0
        %1197 = vmatprep.subr.mxu0 0.0
        %1198 = vmatpush1.msra.mxu0 0.0
        %1199 = vmatprep.subr.mxu0 0.0
        %1200 = vmatpush1.msra.mxu0 0.0
        %1201 = vmatprep.subr.mxu0 0.0
        %1202 = vmatpush1.msra.mxu0 0.0
        %1203 = vmatprep.subr.mxu0 0.0
        %1204 = vmatpush1.msra.mxu0 0.0
        %1205 = vmatprep.subr.mxu0 0.0
        %1206 = vmatpush1.msra.mxu0 0.0
        %1207 = vmatprep.subr.mxu0 0.0
        %1208 = vmatpush1.msra.mxu0 0.0
        %1209 = vmatprep.subr.mxu0 0.0
        %1210 = vmatpush1.msra.mxu0 0.0
        %1211 = vmatprep.subr.mxu0 0.0
        %1212 = vmatpush1.msra.mxu0 0.0
        %1213 = vmatprep.subr.mxu0 0.0
        %1214 = vmatpush1.msra.mxu0 0.0
        %1215 = vmatprep.subr.mxu0 0.0
        %1216 = vmatpush1.msra.mxu0 0.0
        %1217 = vmatprep.subr.mxu0 0.0
        %1218 = vmatpush1.msra.mxu0 0.0
        %1219 = vmatprep.subr.mxu0 0.0
        %1220 = vmatpush1.msra.mxu0 0.0
        %1221 = vmatprep.subr.mxu0 0.0
        %1222 = vmatpush1.msra.mxu0 0.0
        %1223 = vmatprep.subr.mxu0 %v1177
        %1224 = vmatpush1.msra.mxu0 %v1176
        %1225 = vmatprep.subr.mxu0 %v1175
        %1226 = vmatpush1.msra.mxu0 %v1174
        %1227 = vmatprep.subr.mxu0 0.0
        %1228 = vmatpush2.msra.mxu0 0.0
        %1229 = vmatprep.subr.mxu0 0.0
        %1230 = vmatpush2.msra.mxu0 0.0
        %1231 = vmatprep.subr.mxu0 0.0
        %1232 = vmatpush2.msra.mxu0 0.0
        %1233 = vmatprep.subr.mxu0 0.0
        %1234 = vmatpush2.msra.mxu0 0.0
        %1235 = vmatprep.subr.mxu0 0.0
        %1236 = vmatpush2.msra.mxu0 0.0
        %1237 = vmatprep.subr.mxu0 0.0
        %1238 = vmatpush2.msra.mxu0 0.0
        %1239 = vmatprep.subr.mxu0 0.0
        %1240 = vmatpush2.msra.mxu0 0.0
        %1241 = vmatprep.subr.mxu0 0.0
        %1242 = vmatpush2.msra.mxu0 0.0
        %1243 = vmatprep.subr.mxu0 0.0
        %1244 = vmatpush2.msra.mxu0 0.0
        %1245 = vmatprep.subr.mxu0 0.0
        %1246 = vmatpush2.msra.mxu0 0.0
        %1247 = vmatprep.subr.mxu0 0.0
        %1248 = vmatpush2.msra.mxu0 0.0
        %1249 = vmatprep.subr.mxu0 0.0
        %1250 = vmatpush2.msra.mxu0 0.0
        %1251 = vmatprep.subr.mxu0 0.0
        %1252 = vmatpush2.msra.mxu0 0.0
        %1253 = vmatprep.subr.mxu0 0.0
        %1254 = vmatpush2.msra.mxu0 0.0
        %1255 = vmatprep.subr.mxu0 0.0
        %1256 = vmatpush2.msra.mxu0 0.0
        %1257 = vmatprep.subr.mxu0 0.0
        %1258 = vmatpush2.msra.mxu0 0.0
        %1259 = vmatprep.mubr.f32.mxu0 0.0
        %1260 = vmatmul.mubr.f32.gmra.mxu0 %v1193
        %v1261 = vpop.f32.mrf.mxu0
        %v1262 = vadd.f32 %v1183, %v1261
        %v1263 = vpop.f32.mrf.mxu0
        %v1264 = vadd.f32 %v1187, %v1263
        %1265 = vdwg.mxu0
        %vm1266 = vcmp.eq.s32.totalorder %v513, 0
        %v1267 = vsel %vm1266, -1000000.0, %v1262
        %v1269 = vsel %vm523, %v1264, 0
        %1271 = vmatprep.subr.mxu0 0.0
        %1272 = vmatpush1.msra.mxu0 0.0
        %1273 = vmatprep.subr.mxu0 0.0
        %1274 = vmatpush1.msra.mxu0 0.0
        %1275 = vmatprep.subr.mxu0 0.0
        %1276 = vmatpush1.msra.mxu0 0.0
        %1277 = vmatprep.subr.mxu0 0.0
        %1278 = vmatpush1.msra.mxu0 0.0
        %1279 = vmatprep.subr.mxu0 0.0
        %1280 = vmatpush1.msra.mxu0 0.0
        %1281 = vmatprep.subr.mxu0 0.0
        %1282 = vmatpush1.msra.mxu0 0.0
        %1283 = vmatprep.subr.mxu0 0.0
        %1284 = vmatpush1.msra.mxu0 0.0
        %1285 = vmatprep.subr.mxu0 0.0
        %1286 = vmatpush1.msra.mxu0 0.0
        %1287 = vmatprep.subr.mxu0 0.0
        %1288 = vmatpush1.msra.mxu0 0.0
        %1289 = vmatprep.subr.mxu0 0.0
        %1290 = vmatpush1.msra.mxu0 0.0
        %1291 = vmatprep.subr.mxu0 0.0
        %1292 = vmatpush1.msra.mxu0 0.0
        %1293 = vmatprep.subr.mxu0 0.0
        %1294 = vmatpush1.msra.mxu0 0.0
        %1295 = vmatprep.subr.mxu0 0.0
        %1296 = vmatpush1.msra.mxu0 0.0
        %1297 = vmatprep.subr.mxu0 0.0
        %1298 = vmatpush1.msra.mxu0 0.0
        %1299 = vmatprep.subr.mxu0 0.0
        %1300 = vmatpush1.msra.mxu0 %v598
        %1301 = vmatprep.subr.mxu0 0.0
        %1302 = vmatpush1.msra.mxu0 %v597
        %1303 = vmatprep.subr.mxu0 0.0
        %1304 = vmatpush2.msra.mxu0 0.0
        %1305 = vmatprep.subr.mxu0 0.0
        %1306 = vmatpush2.msra.mxu0 0.0
        %1307 = vmatprep.subr.mxu0 0.0
        %1308 = vmatpush2.msra.mxu0 0.0
        %1309 = vmatprep.subr.mxu0 0.0
        %1310 = vmatpush2.msra.mxu0 0.0
        %1311 = vmatprep.subr.mxu0 0.0
        %1312 = vmatpush2.msra.mxu0 0.0
        %1313 = vmatprep.subr.mxu0 0.0
        %1314 = vmatpush2.msra.mxu0 0.0
        %1315 = vmatprep.subr.mxu0 0.0
        %1316 = vmatpush2.msra.mxu0 0.0
        %1317 = vmatprep.subr.mxu0 0.0
        %1318 = vmatpush2.msra.mxu0 0.0
        %1319 = vmatprep.subr.mxu0 0.0
        %1320 = vmatpush2.msra.mxu0 0.0
        %1321 = vmatprep.subr.mxu0 0.0
        %1322 = vmatpush2.msra.mxu0 0.0
        %1323 = vmatprep.subr.mxu0 0.0
        %1324 = vmatpush2.msra.mxu0 0.0
        %1325 = vmatprep.subr.mxu0 0.0
        %1326 = vmatpush2.msra.mxu0 0.0
        %1327 = vmatprep.subr.mxu0 0.0
        %1328 = vmatpush2.msra.mxu0 0.0
        %1329 = vmatprep.subr.mxu0 0.0
        %1330 = vmatpush2.msra.mxu0 0.0
        %1331 = vmatprep.subr.mxu0 0.0
        %1332 = vmatpush2.msra.mxu0 0.0
        %1333 = vmatprep.subr.mxu0 0.0
        %1334 = vmatpush2.msra.mxu0 0.0
        %1335 = vmatprep.mubr.f32.mxu0 0.0
        %1336 = vmatmul.mubr.f32.gmra.mxu0 %v1269
        %v1337 = vpop.f32.mrf.mxu0
        %v1338 = vadd.f32 0.0, %v1337
        %v1339 = vpop.f32.mrf.mxu0
        %1340 = vdwg.mxu0
        %v1341 = vmul.f32 %v507, %v1338
        %1342 = vmatprep.subr.mxu0 0.0
        %1343 = vmatpush1.msra.mxu0 %v688
        %1344 = vmatprep.subr.mxu0 0.0
        %1345 = vmatpush1.msra.mxu0 %v687
        %1346 = vmatprep.subr.mxu0 0.0
        %1347 = vmatpush1.msra.mxu0 %v686
        %1348 = vmatprep.subr.mxu0 0.0
        %1349 = vmatpush1.msra.mxu0 %v685
        %1350 = vmatprep.subr.mxu0 0.0
        %1351 = vmatpush1.msra.mxu0 %v684
        %1352 = vmatprep.subr.mxu0 0.0
        %1353 = vmatpush1.msra.mxu0 %v683
        %1354 = vmatprep.subr.mxu0 0.0
        %1355 = vmatpush1.msra.mxu0 %v682
        %1356 = vmatprep.subr.mxu0 0.0
        %1357 = vmatpush1.msra.mxu0 %v681
        %1358 = vmatprep.subr.mxu0 0.0
        %1359 = vmatpush1.msra.mxu0 %v680
        %1360 = vmatprep.subr.mxu0 0.0
        %1361 = vmatpush1.msra.mxu0 %v679
        %1362 = vmatprep.subr.mxu0 0.0
        %1363 = vmatpush1.msra.mxu0 %v678
        %1364 = vmatprep.subr.mxu0 0.0
        %1365 = vmatpush1.msra.mxu0 %v677
        %1366 = vmatprep.subr.mxu0 0.0
        %1367 = vmatpush1.msra.mxu0 %v676
        %1368 = vmatprep.subr.mxu0 0.0
        %1369 = vmatpush1.msra.mxu0 %v675
        %1370 = vmatprep.subr.mxu0 0.0
        %1371 = vmatpush1.msra.mxu0 %v674
        %1372 = vmatprep.subr.mxu0 0.0
        %1373 = vmatpush1.msra.mxu0 %v673
        %1374 = vmatprep.subr.mxu0 0.0
        %1375 = vmatpush2.msra.mxu0 0.0
        %1376 = vmatprep.subr.mxu0 0.0
        %1377 = vmatpush2.msra.mxu0 0.0
        %1378 = vmatprep.subr.mxu0 0.0
        %1379 = vmatpush2.msra.mxu0 0.0
        %1380 = vmatprep.subr.mxu0 0.0
        %1381 = vmatpush2.msra.mxu0 0.0
        %1382 = vmatprep.subr.mxu0 0.0
        %1383 = vmatpush2.msra.mxu0 0.0
        %1384 = vmatprep.subr.mxu0 0.0
        %1385 = vmatpush2.msra.mxu0 0.0
        %1386 = vmatprep.subr.mxu0 0.0
        %1387 = vmatpush2.msra.mxu0 0.0
        %1388 = vmatprep.subr.mxu0 0.0
        %1389 = vmatpush2.msra.mxu0 0.0
        %1390 = vmatprep.subr.mxu0 0.0
        %1391 = vmatpush2.msra.mxu0 0.0
        %1392 = vmatprep.subr.mxu0 0.0
        %1393 = vmatpush2.msra.mxu0 0.0
        %1394 = vmatprep.subr.mxu0 0.0
        %1395 = vmatpush2.msra.mxu0 0.0
        %1396 = vmatprep.subr.mxu0 0.0
        %1397 = vmatpush2.msra.mxu0 0.0
        %1398 = vmatprep.subr.mxu0 0.0
        %1399 = vmatpush2.msra.mxu0 0.0
        %1400 = vmatprep.subr.mxu0 0.0
        %1401 = vmatpush2.msra.mxu0 0.0
        %1402 = vmatprep.subr.mxu0 0.0
        %1403 = vmatpush2.msra.mxu0 0.0
        %1404 = vmatprep.subr.mxu0 0.0
        %1405 = vmatpush2.msra.mxu0 0.0
        %1406 = vmatprep.mubr.f32.mxu0 0.0
        %1407 = vmatmul.mubr.f32.gmra.mxu0 %v1341
        %v1408 = vpop.f32.mrf.mxu0
        %v1409 = vadd.f32 0.0, %v1408
        %v1410 = vpop.f32.mrf.mxu0
        %1411 = vdwg.mxu0
        %1412 = vset.pattern.permute.xlu0 0
        %1413 = vperm.xlu0 %1412, %v508
        %v1414 = vpop.permute.xlu0 %1413
        %vm1415 = vcmp.eq.s32.totalorder %v513, %v1414
        %1417 = vset.pattern.permute.xlu0 0
        %1418 = vperm.xlu0 %1417, %v1409
        %v1419 = vpop.permute.xlu0 %1418
        %v1421 = vsel %vm1415, %v1419, 0.0
        %v1422 = vadd.f32 %v1421, 0.0
        %1423 = vset.pattern.permute.xlu0 1
        %1424 = vperm.xlu0 %1423, %v508
        %v1425 = vpop.permute.xlu0 %1424
        %vm1426 = vcmp.eq.s32.totalorder %v513, %v1425
        %1427 = vset.pattern.permute.xlu0 1
        %1428 = vperm.xlu0 %1427, %v1409
        %v1429 = vpop.permute.xlu0 %1428
        %v1431 = vsel %vm1426, %v1429, 0.0
        %v1432 = vadd.f32 %v1422, %v1431
        %vm1433 = vmor %vm1415, %vm1426
        %1434 = vset.pattern.permute.xlu0 2
        %1435 = vperm.xlu0 %1434, %v508
        %v1436 = vpop.permute.xlu0 %1435
        %vm1437 = vcmp.eq.s32.totalorder %v513, %v1436
        %1438 = vset.pattern.permute.xlu0 2
        %1439 = vperm.xlu0 %1438, %v1409
        %v1440 = vpop.permute.xlu0 %1439
        %v1442 = vsel %vm1437, %v1440, 0.0
        %v1443 = vadd.f32 %v1432, %v1442
        %vm1444 = vmor %vm1433, %vm1437
        %1445 = vset.pattern.permute.xlu0 3
        %1446 = vperm.xlu0 %1445, %v508
        %v1447 = vpop.permute.xlu0 %1446
        %vm1448 = vcmp.eq.s32.totalorder %v513, %v1447
        %1449 = vset.pattern.permute.xlu0 3
        %1450 = vperm.xlu0 %1449, %v1409
        %v1451 = vpop.permute.xlu0 %1450
        %v1453 = vsel %vm1448, %v1451, 0.0
        %v1454 = vadd.f32 %v1443, %v1453
        %vm1455 = vmor %vm1444, %vm1448
        %1456 = vset.pattern.permute.xlu0 4
        %1457 = vperm.xlu0 %1456, %v508
        %v1458 = vpop.permute.xlu0 %1457
        %vm1459 = vcmp.eq.s32.totalorder %v513, %v1458
        %1460 = vset.pattern.permute.xlu0 4
        %1461 = vperm.xlu0 %1460, %v1409
        %v1462 = vpop.permute.xlu0 %1461
        %v1464 = vsel %vm1459, %v1462, 0.0
        %v1465 = vadd.f32 %v1454, %v1464
        %vm1466 = vmor %vm1455, %vm1459
        %1467 = vset.pattern.permute.xlu0 5
        %1468 = vperm.xlu0 %1467, %v508
        %v1469 = vpop.permute.xlu0 %1468
        %vm1470 = vcmp.eq.s32.totalorder %v513, %v1469
        %1471 = vset.pattern.permute.xlu0 5
        %1472 = vperm.xlu0 %1471, %v1409
        %v1473 = vpop.permute.xlu0 %1472
        %v1475 = vsel %vm1470, %v1473, 0.0
        %v1476 = vadd.f32 %v1465, %v1475
        %vm1477 = vmor %vm1466, %vm1470
        %1478 = vset.pattern.permute.xlu0 6
        %1479 = vperm.xlu0 %1478, %v508
        %v1480 = vpop.permute.xlu0 %1479
        %vm1481 = vcmp.eq.s32.totalorder %v513, %v1480
        %1482 = vset.pattern.permute.xlu0 6
        %1483 = vperm.xlu0 %1482, %v1409
        %v1484 = vpop.permute.xlu0 %1483
        %v1486 = vsel %vm1481, %v1484, 0.0
        %v1487 = vadd.f32 %v1476, %v1486
        %vm1488 = vmor %vm1477, %vm1481
        %1489 = vset.pattern.permute.xlu0 7
        %1490 = vperm.xlu0 %1489, %v508
        %v1491 = vpop.permute.xlu0 %1490
        %vm1492 = vcmp.eq.s32.totalorder %v513, %v1491
        %1493 = vset.pattern.permute.xlu0 7
        %1494 = vperm.xlu0 %1493, %v1409
        %v1495 = vpop.permute.xlu0 %1494
        %v1497 = vsel %vm1492, %v1495, 0.0
        %v1498 = vadd.f32 %v1487, %v1497
        %vm1499 = vmor %vm1488, %vm1492
        %vm1500 = vmxor %vm1499, 1
        %vm1501 = vmor %vm1500, %vm1266
        %v1502 = vsel %vm1501, -1000000.0, %v1498
        %1503 = vmax.xlane.f32.xlu0 %v1267
        %v1504 = vpop.xlane.xlu0 %1503
        %1505 = vmax.xlane.f32.xlu0 %v1502
        %v1506 = vpop.xlane.xlu0 %1505
        %v1507 = vmax.f32 %v1504, %v1506
        %v1508 = vsub.f32 %v1267, %v1507
        %v1509 = vmul.f32 %v1508, 1.442695
        %v1510 = vpow.pop %v1509
        %v1511 = vsub.f32 %v1502, %v1507
        %v1512 = vmul.f32 %v1511, 1.442695
        %v1513 = vpow.pop %v1512
        %v1514 = vadd.f32 %v1510, %v1513
        %1515 = vmax.xlane.f32.xlu0 %v1514
        %v1516 = vpop.xlane.xlu0 %1515
        %vm1517 = vcmp.eq.f32.partialorder %v1514, %v1516
        %v1518 = vsel %vm1517, %v513, 128
        %v1519 = vand.u32 %v1518, 65535
        %v1520 = vshra.s32 %v1518, 16
        %v1521 = vcvt.s32.f32 %v1519
        %v1522 = vcvt.s32.f32 %v1520
        %1523 = vmin.xlane.f32.xlu0 %v1522
        %v1524 = vpop.xlane.xlu0 %1523
        %vm1525 = vcmp.eq.f32.partialorder %v1522, %v1524
        %v1526 = vsel %vm1525, %v1521, inf
        %1527 = vmin.xlane.f32.xlu0 %v1526
        %v1528 = vpop.xlane.xlu0 %1527
        %v1529 = vcvt.f32.s32 %v1528
        %v1530 = vcvt.f32.s32 %v1524
        %v1531 = vshll.u32 %v1530, 16
        %v1532 = vadd.s32 %v1531, %v1529
        %vm1533 = vcmp.eq.s32.totalorder %v508, %v1532
        %v1534 = vsel %vm1533, 1, 0
        %v1535 = vcvt.s32.f32 %v1534
        %v1536 = vmul.f32 %v1535, %v1409
        %v1537 = vand.u32 2147483647, %v1536
        %v1538 = vsel %vm759, %v1537, 0.0
        %1539 = vadd.xlane.f32.xlu0 %v1538
        %v1540 = vpop.xlane.xlu0 %1539
        %v1541 = vmax.f32 %v1540, 1e-12
        %v1542 = vrcp.pop %v1541
        %v1543 = vmul.f32 %v1536, %v1542
        %v1545 = vsel %vm759, %v1543, 0
        %1547 = vmatprep.subr.mxu0 0.0
        %1548 = vmatpush1.xpose.msra.mxu0 %v820
        %1549 = vmatprep.subr.mxu0 0.0
        %1550 = vmatpush1.xpose.msra.mxu0 %v817
        %1551 = vmatprep.subr.mxu0 0.0
        %1552 = vmatpush1.xpose.msra.mxu0 %v814
        %1553 = vmatprep.subr.mxu0 0.0
        %1554 = vmatpush1.xpose.msra.mxu0 %v811
        %1555 = vmatprep.subr.mxu0 0.0
        %1556 = vmatpush1.xpose.msra.mxu0 %v808
        %1557 = vmatprep.subr.mxu0 0.0
        %1558 = vmatpush1.xpose.msra.mxu0 %v805
        %1559 = vmatprep.subr.mxu0 0.0
        %1560 = vmatpush1.xpose.msra.mxu0 %v802
        %1561 = vmatprep.subr.mxu0 0.0
        %1562 = vmatpush1.xpose.msra.mxu0 %v799
        %1563 = vmatprep.subr.mxu0 0.0
        %1564 = vmatpush1.xpose.msra.mxu0 %v796
        %1565 = vmatprep.subr.mxu0 0.0
        %1566 = vmatpush1.xpose.msra.mxu0 %v793
        %1567 = vmatprep.subr.mxu0 0.0
        %1568 = vmatpush1.xpose.msra.mxu0 %v790
        %1569 = vmatprep.subr.mxu0 0.0
        %1570 = vmatpush1.xpose.msra.mxu0 %v787
        %1571 = vmatprep.subr.mxu0 0.0
        %1572 = vmatpush1.xpose.msra.mxu0 %v784
        %1573 = vmatprep.subr.mxu0 0.0
        %1574 = vmatpush1.xpose.msra.mxu0 %v781
        %1575 = vmatprep.subr.mxu0 0.0
        %1576 = vmatpush1.xpose.msra.mxu0 %v778
        %1577 = vmatprep.subr.mxu0 0.0
        %1578 = vmatpush1.xpose.msra.mxu0 %v775
        %1579 = vmatprep.subr.mxu0 0.0
        %1580 = vmatpush2.xpose.msra.mxu0 0.0
        %1581 = vmatprep.subr.mxu0 0.0
        %1582 = vmatpush2.xpose.msra.mxu0 0.0
        %1583 = vmatprep.subr.mxu0 0.0
        %1584 = vmatpush2.xpose.msra.mxu0 0.0
        %1585 = vmatprep.subr.mxu0 0.0
        %1586 = vmatpush2.xpose.msra.mxu0 0.0
        %1587 = vmatprep.subr.mxu0 0.0
        %1588 = vmatpush2.xpose.msra.mxu0 0.0
        %1589 = vmatprep.subr.mxu0 0.0
        %1590 = vmatpush2.xpose.msra.mxu0 0.0
        %1591 = vmatprep.subr.mxu0 0.0
        %1592 = vmatpush2.xpose.msra.mxu0 0.0
        %1593 = vmatprep.subr.mxu0 0.0
        %1594 = vmatpush2.xpose.msra.mxu0 0.0
        %1595 = vmatprep.subr.mxu0 0.0
        %1596 = vmatpush2.xpose.msra.mxu0 0.0
        %1597 = vmatprep.subr.mxu0 0.0
        %1598 = vmatpush2.xpose.msra.mxu0 0.0
        %1599 = vmatprep.subr.mxu0 0.0
        %1600 = vmatpush2.xpose.msra.mxu0 0.0
        %1601 = vmatprep.subr.mxu0 0.0
        %1602 = vmatpush2.xpose.msra.mxu0 0.0
        %1603 = vmatprep.subr.mxu0 0.0
        %1604 = vmatpush2.xpose.msra.mxu0 0.0
        %1605 = vmatprep.subr.mxu0 0.0
        %1606 = vmatpush2.xpose.msra.mxu0 0.0
        %1607 = vmatprep.subr.mxu0 0.0
        %1608 = vmatpush2.xpose.msra.mxu0 0.0
        %1609 = vmatprep.subr.mxu0 0.0
        %1610 = vmatpush2.xpose.msra.mxu0 0.0
        %1611 = vmatprep.mubr.f32.mxu0 0.0
        %1612 = vmatmul.mubr.f32.gmra.mxu0 %v1545
        %v1613 = vpop.f32.mrf.mxu0
        %v1614 = vadd.f32 0.0, %v1613
        %v1615 = vpop.f32.mrf.mxu0
        %1616 = vdwg.mxu0
        %v1617 = vmul.f32 %v1614, %v507
        %1618 = vmatprep.subr.mxu0 0.0
        %1619 = vmatpush1.xpose.msra.mxu0 0.0
        %1620 = vmatprep.subr.mxu0 0.0
        %1621 = vmatpush1.xpose.msra.mxu0 0.0
        %1622 = vmatprep.subr.mxu0 0.0
        %1623 = vmatpush1.xpose.msra.mxu0 0.0
        %1624 = vmatprep.subr.mxu0 0.0
        %1625 = vmatpush1.xpose.msra.mxu0 0.0
        %1626 = vmatprep.subr.mxu0 0.0
        %1627 = vmatpush1.xpose.msra.mxu0 0.0
        %1628 = vmatprep.subr.mxu0 0.0
        %1629 = vmatpush1.xpose.msra.mxu0 0.0
        %1630 = vmatprep.subr.mxu0 0.0
        %1631 = vmatpush1.xpose.msra.mxu0 0.0
        %1632 = vmatprep.subr.mxu0 0.0
        %1633 = vmatpush1.xpose.msra.mxu0 0.0
        %1634 = vmatprep.subr.mxu0 0.0
        %1635 = vmatpush1.xpose.msra.mxu0 0.0
        %1636 = vmatprep.subr.mxu0 0.0
        %1637 = vmatpush1.xpose.msra.mxu0 0.0
        %1638 = vmatprep.subr.mxu0 0.0
        %1639 = vmatpush1.xpose.msra.mxu0 0.0
        %1640 = vmatprep.subr.mxu0 0.0
        %1641 = vmatpush1.xpose.msra.mxu0 0.0
        %1642 = vmatprep.subr.mxu0 0.0
        %1643 = vmatpush1.xpose.msra.mxu0 0.0
        %1644 = vmatprep.subr.mxu0 0.0
        %1645 = vmatpush1.xpose.msra.mxu0 0.0
        %1646 = vmatprep.subr.mxu0 0.0
        %1647 = vmatpush1.xpose.msra.mxu0 %v598
        %1648 = vmatprep.subr.mxu0 0.0
        %1649 = vmatpush1.xpose.msra.mxu0 %v597
        %1650 = vmatprep.subr.mxu0 0.0
        %1651 = vmatpush2.xpose.msra.mxu0 0.0
        %1652 = vmatprep.subr.mxu0 0.0
        %1653 = vmatpush2.xpose.msra.mxu0 0.0
        %1654 = vmatprep.subr.mxu0 0.0
        %1655 = vmatpush2.xpose.msra.mxu0 0.0
        %1656 = vmatprep.subr.mxu0 0.0
        %1657 = vmatpush2.xpose.msra.mxu0 0.0
        %1658 = vmatprep.subr.mxu0 0.0
        %1659 = vmatpush2.xpose.msra.mxu0 0.0
        %1660 = vmatprep.subr.mxu0 0.0
        %1661 = vmatpush2.xpose.msra.mxu0 0.0
        %1662 = vmatprep.subr.mxu0 0.0
        %1663 = vmatpush2.xpose.msra.mxu0 0.0
        %1664 = vmatprep.subr.mxu0 0.0
        %1665 = vmatpush2.xpose.msra.mxu0 0.0
        %1666 = vmatprep.subr.mxu0 0.0
        %1667 = vmatpush2.xpose.msra.mxu0 0.0
        %1668 = vmatprep.subr.mxu0 0.0
        %1669 = vmatpush2.xpose.msra.mxu0 0.0
        %1670 = vmatprep.subr.mxu0 0.0
        %1671 = vmatpush2.xpose.msra.mxu0 0.0
        %1672 = vmatprep.subr.mxu0 0.0
        %1673 = vmatpush2.xpose.msra.mxu0 0.0
        %1674 = vmatprep.subr.mxu0 0.0
        %1675 = vmatpush2.xpose.msra.mxu0 0.0
        %1676 = vmatprep.subr.mxu0 0.0
        %1677 = vmatpush2.xpose.msra.mxu0 0.0
        %1678 = vmatprep.subr.mxu0 0.0
        %1679 = vmatpush2.xpose.msra.mxu0 0.0
        %1680 = vmatprep.subr.mxu0 0.0
        %1681 = vmatpush2.xpose.msra.mxu0 0.0
        %1682 = vmatprep.mubr.f32.mxu0 0.0
        %1683 = vmatmul.mubr.f32.gmra.mxu0 %v1617
        %v1684 = vpop.f32.mrf.mxu0
        %v1685 = vadd.f32 0.0, %v1684
        %v1686 = vpop.f32.mrf.mxu0
        %1687 = vdwg.mxu0
        %1689 = vst.msk [vmem:[#allocation2] sm:$0xff] %vm523, %v1192
        %1690 = vst.msk [vmem:[#allocation3] sm:$0xff] %vm523, %v1685
        %vm1691 = vcmask 7168
        %1692 = vst.msk [vmem:[#allocation4] sm:$0xff] %vm1691, %v1532
        %1693 = vst [vmem:[%s484] sm:$0xff] %v1532
        %1694 = vadd.xlane.f32.xlu0 %v1510
        %v1695 = vpop.xlane.xlu0 %1694
        %1696 = vadd.xlane.f32.xlu0 %v1513
        %v1697 = vpop.xlane.xlu0 %1696
        %v1698 = vadd.f32 %v1695, %v1697
        %v1699 = vrcp.pop %v1698
        %v1700 = vmul.f32 %v1514, %v1699
        %v1701 = vadd.f32 %v1700, 1e-10
        %v1702 = vlog2.pop %v1701
        %v1703 = vmul.f32 %v1702, 0.6931472
        %1704 = vst [vmem:[%s477] sm:$0xff] %v1703
        %s1705 = sand.u32 %s320, 1
        %s1706 = scalar_lea.sflag [#allocation6], %s1705
        %s1707 = sand.u32 %s320, 1
        %s1708 = smul.addr %s1707, 8
        %s1709 = scalar_lea.vmem [#allocation5], %s1708
        %s1710 = sand.u32 %s348, 1
        %s1711 = scalar_lea.sflag [#allocation8], %s1710
        %s1712 = sand.u32 %s348, 1
        %s1713 = smul.addr %s1712, 8
        %s1714 = scalar_lea.vmem [#allocation7], %s1713
        // Predicated region
        $region73: #{tpu_custom_call.1} parent=67 // pred_check
          %p1715 = pneg %p330
        $region74: #{tpu_custom_call.1} parent=67 // pred_check_branch
          %1717 = sbr.rel (%p1715) target = $region76
        $region75: #{tpu_custom_call.1} parent=67 // pred_region
          %s1719 = ssub.s32 128, 128
          %1720 = vsyncadd %s1706, %s1719
          %s1721 = sadd.s32 %s35, %s36
          %s1722 = smul.addr %s1721, 128
          %s1723 = scalar_lea.hbm %s12, %s1722
          %s1725 = sshll.u32 %s1709, 4
          %s1726 = int_to_ptr.vmem [resolvable:$true] %s1725
          %1728 = dma.vmem_to_hbm [thread:$0]  %s1726, 128, %s1723, %s1706
        $region76: #{tpu_custom_call.1} parent=67 // pred_fallthru
          _
        // Predicated region
        $region77: #{tpu_custom_call.1} parent=67 // pred_check
          %p1729 = pneg %p358
        $region78: #{tpu_custom_call.1} parent=67 // pred_check_branch
          %1731 = sbr.rel (%p1729) target = $region80
        $region79: #{tpu_custom_call.1} parent=67 // pred_region
          %s1733 = ssub.s32 128, 128
          %1734 = vsyncadd %s1711, %s1733
          %s1735 = sadd.s32 %s35, %s36
          %s1736 = smul.addr %s1735, 128
          %s1737 = scalar_lea.hbm %s13, %s1736
          %s1739 = sshll.u32 %s1714, 4
          %s1740 = int_to_ptr.vmem [resolvable:$true] %s1739
          %1742 = dma.vmem_to_hbm [thread:$0]  %s1740, 128, %s1737, %s1711
        $region80: #{tpu_custom_call.1} parent=67 // pred_fallthru
          _
      $region68: #{tpu_custom_call.1} parent=5 // pred_fallthru
        _
      %p1743 = scmp.le.s32.totalorder 2, %s26
      // Predicated region
      $region81: #{tpu_custom_call.1} parent=5 // pred_check
        %p1744 = pneg %p1743
      $region82: #{tpu_custom_call.1} parent=5 // pred_check_branch
        %1746 = sbr.rel (%p1744) target = $region84
      $region83: #{tpu_custom_call.1} parent=5 // pred_region
        %s1747 = ssub.s32 %s26, 2
        // Predicated region
        $region85: #{tpu_custom_call.1} parent=83 // pred_check
          %p1748 = pneg %p336
        $region86: #{tpu_custom_call.1} parent=83 // pred_check_branch
          %1750 = sbr.rel (%p1748) target = $region88
        $region87: #{tpu_custom_call.1} parent=83 // pred_region
          %s1751 = sand.u32 %s321, 1
          %s1752 = scalar_lea.sflag [#allocation6], %s1751
          %s1753 = sand.u32 %s321, 1
          %s1754 = smul.addr %s1753, 8
          %s1755 = scalar_lea.vmem [#allocation5], %s1754
          %1756 = dma.done %s1752, 128
        $region88: #{tpu_custom_call.1} parent=83 // pred_fallthru
          _
        // Predicated region
        $region89: #{tpu_custom_call.1} parent=83 // pred_check
          %p1757 = pneg %p364
        $region90: #{tpu_custom_call.1} parent=83 // pred_check_branch
          %1759 = sbr.rel (%p1757) target = $region92
        $region91: #{tpu_custom_call.1} parent=83 // pred_region
          %s1760 = sand.u32 %s349, 1
          %s1761 = scalar_lea.sflag [#allocation8], %s1760
          %s1762 = sand.u32 %s349, 1
          %s1763 = smul.addr %s1762, 8
          %s1764 = scalar_lea.vmem [#allocation7], %s1763
          %1765 = dma.done %s1761, 128
        $region92: #{tpu_custom_call.1} parent=83 // pred_fallthru
          _
      $region84: #{tpu_custom_call.1} parent=5 // pred_fallthru
        _
    $region6: #{tpu_custom_call.1} parent=1 // loop_footer
      %s30 = sadd.s32 1, %s26
    $region7: #{tpu_custom_call.1} parent=1 // loop_footer_branch
      %25 = sbr.rel target = $region3
    $region8: #{tpu_custom_call.1} parent=1 // loop_exit
      _
    %1766 = vsyncpa [#allocation6], 1
    %s1767 = scalar_lea.sflag [#allocation6], 1
    %1768 = vsyncpa %s1767, 1
    %1769 = vsyncpa [#allocation8], 1
    %s1770 = scalar_lea.sflag [#allocation8], 1
    %1771 = vsyncpa %s1770, 1

</llo_original>
